<compile_context>
chip_gen: v5e
topology: v5e:2x2
jax: 0.10.0
libtpu: 0.0.40
codegen_flags: <defaults>
</compile_context>

<pallas_src>
import jax
import jax.numpy as jnp
from jax.experimental import pallas as pl
from jax.experimental.pallas import tpu as pltpu


# ----------------------------- host-side weight packing ----------------------

def _pack_weights(params, c_in, c_node, hidden, c_out):
    """Per source activation s (s=0 is the input, s=l the l-th hidden activation), pack

         We[s]: rows = C_s,               cols = [next main | contract elem]
         Wp[s]: rows = [cs | dg | rs | xn], cols = [per_i | per_j | a2i | a2j | a1]
         Wt[s]: rows = C_s,               cols = [next const | a2c]

    so the kernel needs exactly three dots per activation.  Pure host-side slicing/concat."""
    L = len(hidden)
    skip = params["skip_conn"]
    C = [c_in] + list(hidden)
    if skip:
        offs, o = [0] * (L + 1), 0
        for s in range(1, L + 1):
            offs[s] = o
            o += hidden[s - 1]
        total = o
        contrib = [False] + [True] * L
    else:
        total = hidden[-1]
        offs = [0] * (L + 1)
        contrib = [False] * L + [True]

    w1d, w2d = params["w1d"], params["w2d"]
    f32 = jnp.float32
    packed = []

    for s in range(L + 1):
        c = C[s]
        has_next = s < L
        contributes = contrib[s]
        cnext = C[s + 1] if has_next else 0
        cn = c_node if (s == 0 and has_next) else 0

        wx = wrow = wcol = wtot = wdg = wn1 = wn2 = b_next = None
        if has_next:
            w = params["layers"][s]["w"]
            wx, wrow, wcol, wtot, wdg = (w[k * c:(k + 1) * c] for k in range(5))
            if cn:
                wn1 = w[5 * c:5 * c + cn]
                wn2 = w[5 * c + cn:5 * c + 2 * cn]
            b_next = params["layers"][s]["b"]

        w2x = w2row = w2col = w2tot = w2dg = w1dg = w1row = w1col = None
        if contributes:
            off = offs[s]
            w2x, w2row, w2col, w2tot, w2dg = (
                w2d[k * total + off:k * total + off + c] for k in range(5))
            w1dg, w1row, w1col = (
                w1d[k * total + off:k * total + off + c] for k in range(3))

        def cols(rows, nxt_i, nxt_j, a2i, a2j, a1):
            blocks = []
            if has_next:
                z = jnp.zeros((rows, cnext), f32)
                blocks += [nxt_i if nxt_i is not None else z,
                           nxt_j if nxt_j is not None else z]
            if contributes:
                z = jnp.zeros((rows, c_out), f32)
                blocks += [a2i if a2i is not None else z,
                           a2j if a2j is not None else z,
                           a1 if a1 is not None else z]
            return jnp.concatenate(blocks, axis=1)

        e_blocks = ([wx] if has_next else []) + ([w2x] if contributes else [])
        We = jnp.concatenate(e_blocks, axis=1)

        p_blocks = [cols(c, wcol, None, w2col, None, w1col),   # colsum rows (i-dependent)
                    cols(c, wdg, None, w2dg, None, w1dg),      # diag rows   (i-dependent)
                    cols(c, None, wrow, None, w2row, w1row)]   # rowsum rows (j-dependent)
        if cn:
            p_blocks.append(cols(cn, wn1, wn2, None, None, None))
        Wp = jnp.concatenate(p_blocks, axis=0)

        t_blocks = ([wtot] if has_next else []) + ([w2tot] if contributes else [])
        Wt = jnp.concatenate(t_blocks, axis=1)

        packed.append(dict(We=We, Wp=Wp, Wt=Wt, b_next=b_next,
                           has_next=has_next, contributes=contributes, cnext=cnext))
    return packed


# ----------------------------- fused kernel ---------------------------------

def _build_fused_kernel(N, c_in, c_node, hidden, c_out, meta):
    L = len(hidden)
    C = [c_in] + list(hidden)

    def kernel(*refs):
        idx = 0
        x_ref = refs[idx]; idx += 1
        xn_ref = None
        if c_node > 0:
            xn_ref = refs[idx]; idx += 1
        we_refs, wp_refs, wt_refs, b_refs = [], [], [], []
        for s in range(L + 1):
            we_refs.append(refs[idx]); wp_refs.append(refs[idx + 1])
            wt_refs.append(refs[idx + 2]); idx += 3
            if meta[s]["has_next"]:
                b_refs.append(refs[idx]); idx += 1
            else:
                b_refs.append(None)
        b1d_ref, b2d_ref = refs[idx], refs[idx + 1]; idx += 2
        o1_ref, o2_ref = refs[idx], refs[idx + 1]

        x = x_ref[...]                                   # (bt, N, N, c_in) f32
        bt = x.shape[0]

        # identity mask for diagonal extraction (hoisted, computed once)
        ii = jax.lax.broadcasted_iota(jnp.int32, (N, N), 0)
        jj = jax.lax.broadcasted_iota(jnp.int32, (N, N), 1)
        eye = (ii == jj).astype(jnp.float32)[None, :, :, None]

        def mm(a, b):
            return jnp.dot(a, b, preferred_element_type=jnp.float32)

        def stats(h):
            rs = jnp.sum(h, axis=1)          # (bt,N,C)  indexed by j : sum_i h[i,j]
            cs = jnp.sum(h, axis=2)          # (bt,N,C)  indexed by i : sum_j h[i,j]
            ts = jnp.sum(rs, axis=1)         # (bt,C)    total sum
            # TODO(synk): a strided sublane slice would be cheaper than the eye-mask reduce,
            # but its Mosaic lowering is not guaranteed at this layout; cost is tiny at N=8.
            dg = jnp.sum(h * eye, axis=2)    # (bt,N,C)  h[i,i]
            return rs, cs, ts, dg

        acc2_e = acc2_i = acc2_j = acc2_c = acc1 = None
        h = x
        for s in range(L + 1):
            c = C[s]
            has_next = meta[s]["has_next"]
            contributes = meta[s]["contributes"]
            cnext = meta[s]["cnext"]

            rs, cs, ts, dg = stats(h)
            hf = h.reshape(bt * N * N, c)
            parts = [cs.reshape(bt * N, c), dg.reshape(bt * N, c), rs.reshape(bt * N, c)]
            if s == 0 and xn_ref is not None:
                parts.append(xn_ref[...].reshape(bt * N, c_node))
            statcat = jnp.concatenate(parts, axis=-1)

            E = mm(hf, we_refs[s][...])      # (bt*N*N, [cnext | c_out])
            P = mm(statcat, wp_refs[s][...])  # (bt*N,   [cnext|cnext|c_out|c_out|c_out])
            T = mm(ts, wt_refs[s][...])      # (bt,     [cnext | c_out])

            col_e = col_p = col_t = 0
            h_next = None
            if has_next:
                main = E[:, :cnext].reshape(bt, N, N, cnext)
                per_i = P[:, :cnext].reshape(bt, N, cnext)
                per_j = P[:, cnext:2 * cnext].reshape(bt, N, cnext)
                const = T[:, :cnext] + b_refs[s][...]
                col_e, col_p, col_t = cnext, 2 * cnext, cnext
                y = (main + per_i[:, :, None, :] + per_j[:, None, :, :]
                     + const[:, None, None, :])
                h_next = jnp.tanh(y)
            if contributes:
                e2d = E[:, col_e:col_e + c_out]
                a2i = P[:, col_p:col_p + c_out]
                a2j = P[:, col_p + c_out:col_p + 2 * c_out]
                a1 = P[:, col_p + 2 * c_out:col_p + 3 * c_out]
                a2c = T[:, col_t:col_t + c_out]
                acc2_e = e2d if acc2_e is None else acc2_e + e2d
                acc2_i = a2i if acc2_i is None else acc2_i + a2i
                acc2_j = a2j if acc2_j is None else acc2_j + a2j
                acc2_c = a2c if acc2_c is None else acc2_c + a2c
                acc1 = a1 if acc1 is None else acc1 + a1
            if has_next:
                h = h_next

        b1d = b1d_ref[...]                   # (1, c_out)
        b2d = b2d_ref[...]                   # (1, c_out)
        x2d = (acc2_e.reshape(bt, N, N, c_out)
               + acc2_i.reshape(bt, N, c_out)[:, :, None, :]
               + acc2_j.reshape(bt, N, c_out)[:, None, :, :]
               + (acc2_c + b2d)[:, None, None, :])
        x1d = acc1.reshape(bt, N, c_out) + b1d[None, :, :]

        o1_ref[...] = x1d.astype(o1_ref.dtype)
        o2_ref[...] = x2d.astype(o2_ref.dtype)

    return kernel


# ----------------------------- VMEM / tiling heuristics -----------------------

def _ceil_to(x, m):
    return -(-x // m) * m


def _padded_f32_bytes(shape):
    s = list(shape)
    s[-1] = _ceil_to(s[-1], 128)
    if len(s) >= 2:
        s[-2] = _ceil_to(s[-2], 8)
    n = 1
    for d in s:
        n *= d
    return 4 * n


def _vmem_estimate(bt, N, c_in, c_node, hidden, c_out, weight_shapes):
    cmax = max([c_in, c_out] + list(hidden))
    est = 2 * _padded_f32_bytes((bt, N, N, c_in))                  # x block (double-buffered)
    if c_node:
        est += 2 * _padded_f32_bytes((bt, N, c_node))
    est += 2 * _padded_f32_bytes((bt, N, c_out))                   # o1 block
    est += 2 * _padded_f32_bytes((bt, N, N, c_out))                # o2 block
    est += 2 * sum(_padded_f32_bytes(s) for s in weight_shapes)    # params (default 2x bufs)
    # live temporaries (h, y/main/E, broadcast adds, stats) — generous
    est += 8 * _padded_f32_bytes((bt, N, N, cmax)) + 8 * _padded_f32_bytes((bt, N, cmax))
    return est


def _const_index_map(ndim):
    zeros = (0,) * ndim
    return lambda i: zeros


# ----------------------------- pallas wrapper --------------------------------

def sn2nd_encoder_forward(params, x, x_node=None, mask=None, *, batch_tile=None):
    """Fused Sn2ndEncoder forward: one pallas_call for the whole module."""
    assert mask is None  # TODO(synk): SnConv2 masking semantics not in provided source; only mask=None supported.
    B, N, N2, c_in = x.shape
    assert N == N2
    hidden = [lp["b"].shape[-1] for lp in params["layers"]]
    assert len(hidden) >= 1
    c_out = params["b1d"].shape[-1]
    c_node = 0 if x_node is None else x_node.shape[-1]
    L = len(hidden)

    packed = _pack_weights(params, c_in, c_node, hidden, c_out)

    weight_arrays = []
    for p in packed:
        weight_arrays += [p["We"], p["Wp"], p["Wt"]]
        if p["has_next"]:
            weight_arrays.append(p["b_next"])
    weight_arrays += [params["b1d"], params["b2d"]]
    weight_shapes = [tuple(w.shape) for w in weight_arrays]

    # --- batch tile selection ----------------------------------------------
    budget = 20 * 1024 * 1024                    # conservative vs v7x's 64 MiB physical VMEM
    if batch_tile is None:
        # Keep >= 2 grid steps when B >= 2 so both v7x TensorCores get work; on single-TC
        # chips (v5e/v6e), pass batch_tile=B to collapse to a single grid step.
        max_bt = B if B < 2 else max(1, B // 2)
        bt = 1
        for cand in range(1, max_bt + 1):
            if B % cand == 0 and _vmem_estimate(
                    cand, N, c_in, c_node, hidden, c_out, weight_shapes) <= budget:
                bt = cand
    else:
        bt = min(batch_tile, B)
    assert B % bt == 0
    grid = (B // bt,)

    est = _vmem_estimate(bt, N, c_in, c_node, hidden, c_out, weight_shapes)
    # Raise scoped VMEM above the 16/32 MiB defaults, but stay well inside v7x's 64 MiB.
    vmem_limit = int(min(max(2 * est, 32 * 1024 * 1024), 48 * 1024 * 1024))

    meta = [{k: p[k] for k in ("has_next", "contributes", "cnext")} for p in packed]
    kernel = _build_fused_kernel(N, c_in, c_node, hidden, c_out, meta)

    inputs = [x]
    in_specs = [pl.BlockSpec((bt, N, N, c_in), lambda i: (i, 0, 0, 0))]
    if c_node > 0:
        inputs.append(x_node)
        in_specs.append(pl.BlockSpec((bt, N, c_node), lambda i: (i, 0, 0)))
    for arr in weight_arrays:
        inputs.append(arr)
        # full-array block, constant (rank-generic) index map -> fetched once
        in_specs.append(pl.BlockSpec(tuple(arr.shape), _const_index_map(arr.ndim)))

    out_shape = (jax.ShapeDtypeStruct((B, N, c_out), jnp.float32),
                 jax.ShapeDtypeStruct((B, N, N, c_out), jnp.float32))
    out_specs = (pl.BlockSpec((bt, N, c_out), lambda i: (i, 0, 0)),
                 pl.BlockSpec((bt, N, N, c_out), lambda i: (i, 0, 0, 0)))

    # advisory cost estimate for the XLA scheduler
    flops = 0
    for p in packed:
        flops += 2 * (N * N) * p["We"].shape[0] * p["We"].shape[1]
        flops += 2 * N * p["Wp"].shape[0] * p["Wp"].shape[1]
        flops += 2 * p["Wt"].shape[0] * p["Wt"].shape[1]
    flops *= B
    transcendentals = B * N * N * sum(hidden)
    bytes_accessed = 4 * (x.size + (x_node.size if x_node is not None else 0)
                          + sum(int(w.size) for w in weight_arrays)
                          + B * N * c_out + B * N * N * c_out)
    cost = pl.CostEstimate(flops=int(flops), transcendentals=int(transcendentals),
                           bytes_accessed=int(bytes_accessed))

    return pl.pallas_call(
        kernel,
        out_shape=out_shape,
        grid=grid,
        in_specs=in_specs,
        out_specs=out_specs,
        compiler_params=pltpu.CompilerParams(
            dimension_semantics=("parallel",),
            vmem_limit_bytes=vmem_limit),
        cost_estimate=cost,
    )(*inputs)


# ----------------------------- parameters ------------------------------------

def _linear_init(key, fan_in, fan_out):
    # mimics nn.Linear default init: U(-1/sqrt(fan_in), 1/sqrt(fan_in))
    k_w, k_b = jax.random.split(key)
    bound = 1.0 / jnp.sqrt(jnp.float32(fan_in))
    w = jax.random.uniform(k_w, (fan_in, fan_out), jnp.float32, -1.0, 1.0) * bound
    b = jax.random.uniform(k_b, (1, fan_out), jnp.float32, -1.0, 1.0) * bound
    return w, b


def make_sn2nd_encoder_params(key, in_channels, hidden_channel_list, out_channels,
                              in_node_channels=0, skip_conn=True):
    params = {"layers": [], "skip_conn": skip_conn}
    in_c, node_c, total = in_channels, in_node_channels, 0
    for out_c in hidden_channel_list:
        key, sub = jax.random.split(key)
        fan_in = 5 * in_c + 2 * node_c
        w, b = _linear_init(sub, fan_in, out_c)
        params["layers"].append({"w": w, "b": b})
        in_c = out_c
        total += out_c
        node_c = 0
    contract_in = total if skip_conn else in_c
    key, k1, k2 = jax.random.split(key, 3)
    params["w1d"], params["b1d"] = _linear_init(k1, 3 * contract_in, out_channels)
    params["w2d"], params["b2d"] = _linear_init(k2, 5 * contract_in, out_channels)
    return params


# ------------------------ plain-JAX reference (for checking) -----------------

def _ref_snconv2(x, xn, w, b):
    B, N, _, _ = x.shape
    eye = jnp.eye(N, dtype=x.dtype)
    row = jnp.broadcast_to(jnp.sum(x, axis=1, keepdims=True), x.shape)
    col = jnp.broadcast_to(jnp.sum(x, axis=2, keepdims=True), x.shape)
    tot = jnp.broadcast_to(jnp.sum(x, axis=(1, 2), keepdims=True), x.shape)
    diag = jnp.sum(x * eye[None, :, :, None], axis=2)
    feats = [x, row, col, tot, jnp.broadcast_to(diag[:, :, None, :], x.shape)]
    if xn is not None:
        cn = xn.shape[-1]
        feats.append(jnp.broadcast_to(xn[:, :, None, :], (B, N, N, cn)))
        feats.append(jnp.broadcast_to(xn[:, None, :, :], (B, N, N, cn)))
    f = jnp.concatenate(feats, axis=-1)
    return jnp.einsum("bijf,fo->bijo", f, w) + b[None, :, :]


def _ref_snconv2to1(x, w, b):
    N = x.shape[1]
    eye = jnp.eye(N, dtype=x.dtype)
    diag = jnp.sum(x * eye[None, :, :, None], axis=2)
    rsum = jnp.sum(x, axis=1)
    csum = jnp.sum(x, axis=2)
    f = jnp.concatenate([diag, rsum, csum], axis=-1)
    return jnp.einsum("bnf,fo->bno", f, w) + b[None, :, :]


def _reference_forward(params, x, x_node=None):
    skip = params["skip_conn"]
    x_all = []
    for lp in params["layers"]:
        x = jnp.tanh(_ref_snconv2(x, x_node, lp["w"], lp["b"]))
        x_node = None
        if skip:
            x_all.append(x)
    if skip:
        x = jnp.concatenate(x_all, axis=3)
    x_1d = _ref_snconv2to1(x, params["w1d"], params["b1d"])
    x_2d = _ref_snconv2(x, None, params["w2d"], params["b2d"])
    return x_1d, x_2d


# ----------------------------------- main ------------------------------------

if __name__ == "__main__":
    B, N = 2, 8
    in_channels, in_node_channels = 4, 3
    hidden_channel_list = [8, 8]
    out_channels = 6

    key = jax.random.PRNGKey(0)
    k_params, k_x, k_xn = jax.random.split(key, 3)

    x = jax.random.normal(k_x, (B, N, N, in_channels), jnp.float32)
    x_node = jax.random.normal(k_xn, (B, N, in_node_channels), jnp.float32)

    for skip in (True, False):
        k_params, sub = jax.random.split(k_params)
        params = make_sn2nd_encoder_params(
            sub, in_channels, hidden_channel_list, out_channels,
            in_node_channels=in_node_channels, skip_conn=skip)

        x_1d, x_2d = sn2nd_encoder_forward(params, x, x_node=x_node, mask=None)
        jax.block_until_ready((x_1d, x_2d))

        assert x_1d.shape == (B, N, out_channels)
        assert x_2d.shape == (B, N, N, out_channels)

        # verify the fused/factored kernel against the plain-JAX (concat-based) reference
        r_1d, r_2d = _reference_forward(params, x, x_node=x_node)
        err1 = float(jnp.max(jnp.abs(x_1d - r_1d)))
        err2 = float(jnp.max(jnp.abs(x_2d - r_2d)))
        assert err1 < 1e-4 and err2 < 1e-4, (skip, err1, err2)

    print("KERNEL_OK")
</pallas_src>

<mosaic_0001>
module attributes {stable_mosaic.version = 11 : i64} {
  func.func @kernel(%arg0: i32, %arg1: memref<1x8x8x4xf32, #tpu.memory_space<vmem>>, %arg2: memref<1x8x3xf32, #tpu.memory_space<vmem>>, %arg3: memref<4x8xf32, #tpu.memory_space<vmem>>, %arg4: memref<15x16xf32, #tpu.memory_space<vmem>>, %arg5: memref<4x8xf32, #tpu.memory_space<vmem>>, %arg6: memref<1x8xf32, #tpu.memory_space<vmem>>, %arg7: memref<8x14xf32, #tpu.memory_space<vmem>>, %arg8: memref<24x34xf32, #tpu.memory_space<vmem>>, %arg9: memref<8x14xf32, #tpu.memory_space<vmem>>, %arg10: memref<1x8xf32, #tpu.memory_space<vmem>>, %arg11: memref<8x6xf32, #tpu.memory_space<vmem>>, %arg12: memref<24x18xf32, #tpu.memory_space<vmem>>, %arg13: memref<8x6xf32, #tpu.memory_space<vmem>>, %arg14: memref<1x6xf32, #tpu.memory_space<vmem>>, %arg15: memref<1x6xf32, #tpu.memory_space<vmem>>, %arg16: memref<1x8x6xf32, #tpu.memory_space<vmem>>, %arg17: memref<1x8x8x6xf32, #tpu.memory_space<vmem>>) attributes {dimension_semantics = [#tpu.dimension_semantics<parallel>], iteration_bounds = array<i64: 2>, scalar_prefetch = 0 : i64, scratch_operands = 0 : i64, tpu.core_type = #tpu.core_type<tc>, window_params = [{transform_indices = @transform_0, window_bounds = array<i64: 1, 8, 8, 4>}, {transform_indices = @transform_1, window_bounds = array<i64: 1, 8, 3>}, {pipeline_mode = #tpu.pipeline_mode<synchronous>, transform_indices = @transform_2, window_bounds = array<i64: 4, 8>}, {pipeline_mode = #tpu.pipeline_mode<synchronous>, transform_indices = @transform_3, window_bounds = array<i64: 15, 16>}, {pipeline_mode = #tpu.pipeline_mode<synchronous>, transform_indices = @transform_4, window_bounds = array<i64: 4, 8>}, {pipeline_mode = #tpu.pipeline_mode<synchronous>, transform_indices = @transform_5, window_bounds = array<i64: 1, 8>}, {pipeline_mode = #tpu.pipeline_mode<synchronous>, transform_indices = @transform_6, window_bounds = array<i64: 8, 14>}, {pipeline_mode = #tpu.pipeline_mode<synchronous>, transform_indices = @transform_7, window_bounds = array<i64: 24, 34>}, {pipeline_mode = #tpu.pipeline_mode<synchronous>, transform_indices = @transform_8, window_bounds = array<i64: 8, 14>}, {pipeline_mode = #tpu.pipeline_mode<synchronous>, transform_indices = @transform_9, window_bounds = array<i64: 1, 8>}, {pipeline_mode = #tpu.pipeline_mode<synchronous>, transform_indices = @transform_10, window_bounds = array<i64: 8, 6>}, {pipeline_mode = #tpu.pipeline_mode<synchronous>, transform_indices = @transform_11, window_bounds = array<i64: 24, 18>}, {pipeline_mode = #tpu.pipeline_mode<synchronous>, transform_indices = @transform_12, window_bounds = array<i64: 8, 6>}, {pipeline_mode = #tpu.pipeline_mode<synchronous>, transform_indices = @transform_13, window_bounds = array<i64: 1, 6>}, {pipeline_mode = #tpu.pipeline_mode<synchronous>, transform_indices = @transform_14, window_bounds = array<i64: 1, 6>}, {transform_indices = @transform_15, window_bounds = array<i64: 1, 8, 6>}, {transform_indices = @transform_16, window_bounds = array<i64: 1, 8, 8, 6>}]} {
    %c0 = arith.constant 0 : index
    %c0_0 = arith.constant 0 : index
    %c0_1 = arith.constant 0 : index
    %c0_2 = arith.constant 0 : index
    %0 = vector.load %arg1[%c0, %c0_0, %c0_1, %c0_2] : memref<1x8x8x4xf32, #tpu.memory_space<vmem>>, vector<1x8x8x4xf32>
    %1 = tpu.iota {dimensions = array<i32: 0>} : vector<8x8xi32>
    %2 = tpu.iota {dimensions = array<i32: 1>} : vector<8x8xi32>
    %3 = arith.cmpi eq, %1, %2 : vector<8x8xi32>
    %4 = arith.extui %3 : vector<8x8xi1> to vector<8x8xi32>
    %5 = arith.sitofp %4 : vector<8x8xi32> to vector<8x8xf32>
    %6 = vector.shape_cast %5 : vector<8x8xf32> to vector<1x8x8x1xf32>
    %cst = arith.constant dense<0.000000e+00> : vector<1x8x4xf32>
    %7 = vector.multi_reduction <add>, %0, %cst [1] : vector<1x8x8x4xf32> to vector<1x8x4xf32>
    %cst_3 = arith.constant dense<0.000000e+00> : vector<1x8x4xf32>
    %8 = vector.multi_reduction <add>, %0, %cst_3 [2] : vector<1x8x8x4xf32> to vector<1x8x4xf32>
    %cst_4 = arith.constant dense<0.000000e+00> : vector<1x4xf32>
    %9 = vector.multi_reduction <add>, %7, %cst_4 [1] : vector<1x8x4xf32> to vector<1x4xf32>
    %10 = vector.broadcast %6 : vector<1x8x8x1xf32> to vector<1x8x8x4xf32>
    %11 = arith.mulf %0, %10 : vector<1x8x8x4xf32>
    %cst_5 = arith.constant dense<0.000000e+00> : vector<1x8x4xf32>
    %12 = vector.multi_reduction <add>, %11, %cst_5 [2] : vector<1x8x8x4xf32> to vector<1x8x4xf32>
    %13 = vector.shape_cast %0 : vector<1x8x8x4xf32> to vector<64x4xf32>
    %14 = vector.shape_cast %8 : vector<1x8x4xf32> to vector<8x4xf32>
    %15 = vector.shape_cast %12 : vector<1x8x4xf32> to vector<8x4xf32>
    %16 = vector.shape_cast %7 : vector<1x8x4xf32> to vector<8x4xf32>
    %c0_6 = arith.constant 0 : index
    %c0_7 = arith.constant 0 : index
    %c0_8 = arith.constant 0 : index
    %17 = vector.load %arg2[%c0_6, %c0_7, %c0_8] : memref<1x8x3xf32, #tpu.memory_space<vmem>>, vector<1x8x3xf32>
    %18 = vector.shape_cast %17 : vector<1x8x3xf32> to vector<8x3xf32>
    %19 = tpu.concatenate %14, %15, %16, %18 in 1 : vector<8x4xf32>, vector<8x4xf32>, vector<8x4xf32>, vector<8x3xf32> -> vector<8x15xf32>
    %c0_9 = arith.constant 0 : index
    %c0_10 = arith.constant 0 : index
    %20 = vector.load %arg3[%c0_9, %c0_10] : memref<4x8xf32, #tpu.memory_space<vmem>>, vector<4x8xf32>
    %cst_11 = arith.constant dense<0.000000e+00> : vector<64x8xf32>
    %21 = tpu.matmul %13, %20, %cst_11 {dimension_numbers = #tpu.dot_dimension_numbers<[1], [0], [0], [1], [0, 0, 1, 1], [], []>} : vector<64x4xf32>, vector<4x8xf32>, vector<64x8xf32> -> vector<64x8xf32>
    %c0_12 = arith.constant 0 : index
    %c0_13 = arith.constant 0 : index
    %22 = vector.load %arg4[%c0_12, %c0_13] : memref<15x16xf32, #tpu.memory_space<vmem>>, vector<15x16xf32>
    %cst_14 = arith.constant dense<0.000000e+00> : vector<8x16xf32>
    %23 = tpu.matmul %19, %22, %cst_14 {dimension_numbers = #tpu.dot_dimension_numbers<[1], [0], [0], [1], [0, 0, 1, 1], [], []>} : vector<8x15xf32>, vector<15x16xf32>, vector<8x16xf32> -> vector<8x16xf32>
    %c0_15 = arith.constant 0 : index
    %c0_16 = arith.constant 0 : index
    %24 = vector.load %arg5[%c0_15, %c0_16] : memref<4x8xf32, #tpu.memory_space<vmem>>, vector<4x8xf32>
    %cst_17 = arith.constant dense<0.000000e+00> : vector<1x8xf32>
    %25 = tpu.matmul %9, %24, %cst_17 {dimension_numbers = #tpu.dot_dimension_numbers<[1], [0], [0], [1], [0, 0, 1, 1], [], []>} : vector<1x4xf32>, vector<4x8xf32>, vector<1x8xf32> -> vector<1x8xf32>
    %26 = vector.shape_cast %21 : vector<64x8xf32> to vector<1x8x8x8xf32>
    %27 = vector.extract_strided_slice %23 {offsets = [0, 0], sizes = [8, 8], strides = [1, 1]} : vector<8x16xf32> to vector<8x8xf32>
    %28 = vector.shape_cast %27 : vector<8x8xf32> to vector<1x8x8xf32>
    %29 = vector.extract_strided_slice %23 {offsets = [0, 8], sizes = [8, 8], strides = [1, 1]} : vector<8x16xf32> to vector<8x8xf32>
    %30 = vector.shape_cast %29 : vector<8x8xf32> to vector<1x8x8xf32>
    %c0_18 = arith.constant 0 : index
    %c0_19 = arith.constant 0 : index
    %31 = vector.load %arg6[%c0_18, %c0_19] : memref<1x8xf32, #tpu.memory_space<vmem>>, vector<1x8xf32>
    %32 = arith.addf %25, %31 : vector<1x8xf32>
    %33 = vector.shape_cast %28 : vector<1x8x8xf32> to vector<1x8x1x8xf32>
    %34 = vector.broadcast %33 : vector<1x8x1x8xf32> to vector<1x8x8x8xf32>
    %35 = arith.addf %26, %34 : vector<1x8x8x8xf32>
    %36 = vector.shape_cast %30 : vector<1x8x8xf32> to vector<1x1x8x8xf32>
    %37 = vector.broadcast %36 : vector<1x1x8x8xf32> to vector<1x8x8x8xf32>
    %38 = arith.addf %35, %37 : vector<1x8x8x8xf32>
    %39 = vector.shape_cast %32 : vector<1x8xf32> to vector<1x1x1x8xf32>
    %40 = vector.broadcast %39 : vector<1x1x1x8xf32> to vector<1x8x8x8xf32>
    %41 = arith.addf %38, %40 : vector<1x8x8x8xf32>
    %42 = math.tanh %41 : vector<1x8x8x8xf32>
    %cst_20 = arith.constant dense<0.000000e+00> : vector<1x8x8xf32>
    %43 = vector.multi_reduction <add>, %42, %cst_20 [1] : vector<1x8x8x8xf32> to vector<1x8x8xf32>
    %cst_21 = arith.constant dense<0.000000e+00> : vector<1x8x8xf32>
    %44 = vector.multi_reduction <add>, %42, %cst_21 [2] : vector<1x8x8x8xf32> to vector<1x8x8xf32>
    %cst_22 = arith.constant dense<0.000000e+00> : vector<1x8xf32>
    %45 = vector.multi_reduction <add>, %43, %cst_22 [1] : vector<1x8x8xf32> to vector<1x8xf32>
    %46 = vector.broadcast %6 : vector<1x8x8x1xf32> to vector<1x8x8x8xf32>
    %47 = arith.mulf %42, %46 : vector<1x8x8x8xf32>
    %cst_23 = arith.constant dense<0.000000e+00> : vector<1x8x8xf32>
    %48 = vector.multi_reduction <add>, %47, %cst_23 [2] : vector<1x8x8x8xf32> to vector<1x8x8xf32>
    %49 = vector.shape_cast %42 : vector<1x8x8x8xf32> to vector<64x8xf32>
    %50 = vector.shape_cast %44 : vector<1x8x8xf32> to vector<8x8xf32>
    %51 = vector.shape_cast %48 : vector<1x8x8xf32> to vector<8x8xf32>
    %52 = vector.shape_cast %43 : vector<1x8x8xf32> to vector<8x8xf32>
    %53 = tpu.concatenate %50, %51, %52 in 1 : vector<8x8xf32>, vector<8x8xf32>, vector<8x8xf32> -> vector<8x24xf32>
    %c0_24 = arith.constant 0 : index
    %c0_25 = arith.constant 0 : index
    %54 = vector.load %arg7[%c0_24, %c0_25] : memref<8x14xf32, #tpu.memory_space<vmem>>, vector<8x14xf32>
    %cst_26 = arith.constant dense<0.000000e+00> : vector<64x14xf32>
    %55 = tpu.matmul %49, %54, %cst_26 {dimension_numbers = #tpu.dot_dimension_numbers<[1], [0], [0], [1], [0, 0, 1, 1], [], []>} : vector<64x8xf32>, vector<8x14xf32>, vector<64x14xf32> -> vector<64x14xf32>
    %c0_27 = arith.constant 0 : index
    %c0_28 = arith.constant 0 : index
    %56 = vector.load %arg8[%c0_27, %c0_28] : memref<24x34xf32, #tpu.memory_space<vmem>>, vector<24x34xf32>
    %cst_29 = arith.constant dense<0.000000e+00> : vector<8x34xf32>
    %57 = tpu.matmul %53, %56, %cst_29 {dimension_numbers = #tpu.dot_dimension_numbers<[1], [0], [0], [1], [0, 0, 1, 1], [], []>} : vector<8x24xf32>, vector<24x34xf32>, vector<8x34xf32> -> vector<8x34xf32>
    %c0_30 = arith.constant 0 : index
    %c0_31 = arith.constant 0 : index
    %58 = vector.load %arg9[%c0_30, %c0_31] : memref<8x14xf32, #tpu.memory_space<vmem>>, vector<8x14xf32>
    %cst_32 = arith.constant dense<0.000000e+00> : vector<1x14xf32>
    %59 = tpu.matmul %45, %58, %cst_32 {dimension_numbers = #tpu.dot_dimension_numbers<[1], [0], [0], [1], [0, 0, 1, 1], [], []>} : vector<1x8xf32>, vector<8x14xf32>, vector<1x14xf32> -> vector<1x14xf32>
    %60 = vector.extract_strided_slice %55 {offsets = [0, 0], sizes = [64, 8], strides = [1, 1]} : vector<64x14xf32> to vector<64x8xf32>
    %61 = vector.shape_cast %60 : vector<64x8xf32> to vector<1x8x8x8xf32>
    %62 = vector.extract_strided_slice %57 {offsets = [0, 0], sizes = [8, 8], strides = [1, 1]} : vector<8x34xf32> to vector<8x8xf32>
    %63 = vector.shape_cast %62 : vector<8x8xf32> to vector<1x8x8xf32>
    %64 = vector.extract_strided_slice %57 {offsets = [0, 8], sizes = [8, 8], strides = [1, 1]} : vector<8x34xf32> to vector<8x8xf32>
    %65 = vector.shape_cast %64 : vector<8x8xf32> to vector<1x8x8xf32>
    %66 = vector.extract_strided_slice %59 {offsets = [0, 0], sizes = [1, 8], strides = [1, 1]} : vector<1x14xf32> to vector<1x8xf32>
    %c0_33 = arith.constant 0 : index
    %c0_34 = arith.constant 0 : index
    %67 = vector.load %arg10[%c0_33, %c0_34] : memref<1x8xf32, #tpu.memory_space<vmem>>, vector<1x8xf32>
    %68 = arith.addf %66, %67 : vector<1x8xf32>
    %69 = vector.shape_cast %63 : vector<1x8x8xf32> to vector<1x8x1x8xf32>
    %70 = vector.broadcast %69 : vector<1x8x1x8xf32> to vector<1x8x8x8xf32>
    %71 = arith.addf %61, %70 : vector<1x8x8x8xf32>
    %72 = vector.shape_cast %65 : vector<1x8x8xf32> to vector<1x1x8x8xf32>
    %73 = vector.broadcast %72 : vector<1x1x8x8xf32> to vector<1x8x8x8xf32>
    %74 = arith.addf %71, %73 : vector<1x8x8x8xf32>
    %75 = vector.shape_cast %68 : vector<1x8xf32> to vector<1x1x1x8xf32>
    %76 = vector.broadcast %75 : vector<1x1x1x8xf32> to vector<1x8x8x8xf32>
    %77 = arith.addf %74, %76 : vector<1x8x8x8xf32>
    %78 = math.tanh %77 : vector<1x8x8x8xf32>
    %79 = vector.extract_strided_slice %55 {offsets = [0, 8], sizes = [64, 6], strides = [1, 1]} : vector<64x14xf32> to vector<64x6xf32>
    %80 = vector.extract_strided_slice %57 {offsets = [0, 16], sizes = [8, 6], strides = [1, 1]} : vector<8x34xf32> to vector<8x6xf32>
    %81 = vector.extract_strided_slice %57 {offsets = [0, 22], sizes = [8, 6], strides = [1, 1]} : vector<8x34xf32> to vector<8x6xf32>
    %82 = vector.extract_strided_slice %57 {offsets = [0, 28], sizes = [8, 6], strides = [1, 1]} : vector<8x34xf32> to vector<8x6xf32>
    %83 = vector.extract_strided_slice %59 {offsets = [0, 8], sizes = [1, 6], strides = [1, 1]} : vector<1x14xf32> to vector<1x6xf32>
    %cst_35 = arith.constant dense<0.000000e+00> : vector<1x8x8xf32>
    %84 = vector.multi_reduction <add>, %78, %cst_35 [1] : vector<1x8x8x8xf32> to vector<1x8x8xf32>
    %cst_36 = arith.constant dense<0.000000e+00> : vector<1x8x8xf32>
    %85 = vector.multi_reduction <add>, %78, %cst_36 [2] : vector<1x8x8x8xf32> to vector<1x8x8xf32>
    %cst_37 = arith.constant dense<0.000000e+00> : vector<1x8xf32>
    %86 = vector.multi_reduction <add>, %84, %cst_37 [1] : vector<1x8x8xf32> to vector<1x8xf32>
    %87 = vector.broadcast %6 : vector<1x8x8x1xf32> to vector<1x8x8x8xf32>
    %88 = arith.mulf %78, %87 : vector<1x8x8x8xf32>
    %cst_38 = arith.constant dense<0.000000e+00> : vector<1x8x8xf32>
    %89 = vector.multi_reduction <add>, %88, %cst_38 [2] : vector<1x8x8x8xf32> to vector<1x8x8xf32>
    %90 = vector.shape_cast %78 : vector<1x8x8x8xf32> to vector<64x8xf32>
    %91 = vector.shape_cast %85 : vector<1x8x8xf32> to vector<8x8xf32>
    %92 = vector.shape_cast %89 : vector<1x8x8xf32> to vector<8x8xf32>
    %93 = vector.shape_cast %84 : vector<1x8x8xf32> to vector<8x8xf32>
    %94 = tpu.concatenate %91, %92, %93 in 1 : vector<8x8xf32>, vector<8x8xf32>, vector<8x8xf32> -> vector<8x24xf32>
    %c0_39 = arith.constant 0 : index
    %c0_40 = arith.constant 0 : index
    %95 = vector.load %arg11[%c0_39, %c0_40] : memref<8x6xf32, #tpu.memory_space<vmem>>, vector<8x6xf32>
    %cst_41 = arith.constant dense<0.000000e+00> : vector<64x6xf32>
    %96 = tpu.matmul %90, %95, %cst_41 {dimension_numbers = #tpu.dot_dimension_numbers<[1], [0], [0], [1], [0, 0, 1, 1], [], []>} : vector<64x8xf32>, vector<8x6xf32>, vector<64x6xf32> -> vector<64x6xf32>
    %c0_42 = arith.constant 0 : index
    %c0_43 = arith.constant 0 : index
    %97 = vector.load %arg12[%c0_42, %c0_43] : memref<24x18xf32, #tpu.memory_space<vmem>>, vector<24x18xf32>
    %cst_44 = arith.constant dense<0.000000e+00> : vector<8x18xf32>
    %98 = tpu.matmul %94, %97, %cst_44 {dimension_numbers = #tpu.dot_dimension_numbers<[1], [0], [0], [1], [0, 0, 1, 1], [], []>} : vector<8x24xf32>, vector<24x18xf32>, vector<8x18xf32> -> vector<8x18xf32>
    %c0_45 = arith.constant 0 : index
    %c0_46 = arith.constant 0 : index
    %99 = vector.load %arg13[%c0_45, %c0_46] : memref<8x6xf32, #tpu.memory_space<vmem>>, vector<8x6xf32>
    %cst_47 = arith.constant dense<0.000000e+00> : vector<1x6xf32>
    %100 = tpu.matmul %86, %99, %cst_47 {dimension_numbers = #tpu.dot_dimension_numbers<[1], [0], [0], [1], [0, 0, 1, 1], [], []>} : vector<1x8xf32>, vector<8x6xf32>, vector<1x6xf32> -> vector<1x6xf32>
    %101 = vector.extract_strided_slice %98 {offsets = [0, 0], sizes = [8, 6], strides = [1, 1]} : vector<8x18xf32> to vector<8x6xf32>
    %102 = vector.extract_strided_slice %98 {offsets = [0, 6], sizes = [8, 6], strides = [1, 1]} : vector<8x18xf32> to vector<8x6xf32>
    %103 = vector.extract_strided_slice %98 {offsets = [0, 12], sizes = [8, 6], strides = [1, 1]} : vector<8x18xf32> to vector<8x6xf32>
    %104 = arith.addf %79, %96 : vector<64x6xf32>
    %105 = arith.addf %80, %101 : vector<8x6xf32>
    %106 = arith.addf %81, %102 : vector<8x6xf32>
    %107 = arith.addf %83, %100 : vector<1x6xf32>
    %108 = arith.addf %82, %103 : vector<8x6xf32>
    %c0_48 = arith.constant 0 : index
    %c0_49 = arith.constant 0 : index
    %109 = vector.load %arg14[%c0_48, %c0_49] : memref<1x6xf32, #tpu.memory_space<vmem>>, vector<1x6xf32>
    %c0_50 = arith.constant 0 : index
    %c0_51 = arith.constant 0 : index
    %110 = vector.load %arg15[%c0_50, %c0_51] : memref<1x6xf32, #tpu.memory_space<vmem>>, vector<1x6xf32>
    %111 = vector.shape_cast %104 : vector<64x6xf32> to vector<1x8x8x6xf32>
    %112 = vector.shape_cast %105 : vector<8x6xf32> to vector<1x8x6xf32>
    %113 = vector.shape_cast %112 : vector<1x8x6xf32> to vector<1x8x1x6xf32>
    %114 = vector.broadcast %113 : vector<1x8x1x6xf32> to vector<1x8x8x6xf32>
    %115 = arith.addf %111, %114 : vector<1x8x8x6xf32>
    %116 = vector.shape_cast %106 : vector<8x6xf32> to vector<1x8x6xf32>
    %117 = vector.shape_cast %116 : vector<1x8x6xf32> to vector<1x1x8x6xf32>
    %118 = vector.broadcast %117 : vector<1x1x8x6xf32> to vector<1x8x8x6xf32>
    %119 = arith.addf %115, %118 : vector<1x8x8x6xf32>
    %120 = arith.addf %107, %110 : vector<1x6xf32>
    %121 = vector.shape_cast %120 : vector<1x6xf32> to vector<1x1x1x6xf32>
    %122 = vector.broadcast %121 : vector<1x1x1x6xf32> to vector<1x8x8x6xf32>
    %123 = arith.addf %119, %122 : vector<1x8x8x6xf32>
    %124 = vector.shape_cast %108 : vector<8x6xf32> to vector<1x8x6xf32>
    %125 = vector.shape_cast %109 : vector<1x6xf32> to vector<1x1x6xf32>
    %126 = vector.broadcast %125 : vector<1x1x6xf32> to vector<1x8x6xf32>
    %127 = arith.addf %124, %126 : vector<1x8x6xf32>
    %c0_52 = arith.constant 0 : index
    %c0_53 = arith.constant 0 : index
    %c0_54 = arith.constant 0 : index
    %128 = vector.load %arg16[%c0_52, %c0_53, %c0_54] : memref<1x8x6xf32, #tpu.memory_space<vmem>>, vector<1x8x6xf32>
    tpu.vector_store %arg16[%c0_52, %c0_53, %c0_54], %127 {strides = array<i32>} : memref<1x8x6xf32, #tpu.memory_space<vmem>>, vector<1x8x6xf32>,
    %c0_55 = arith.constant 0 : index
    %c0_56 = arith.constant 0 : index
    %c0_57 = arith.constant 0 : index
    %c0_58 = arith.constant 0 : index
    %129 = vector.load %arg17[%c0_55, %c0_56, %c0_57, %c0_58] : memref<1x8x8x6xf32, #tpu.memory_space<vmem>>, vector<1x8x8x6xf32>
    tpu.vector_store %arg17[%c0_55, %c0_56, %c0_57, %c0_58], %123 {strides = array<i32>} : memref<1x8x8x6xf32, #tpu.memory_space<vmem>>, vector<1x8x8x6xf32>,
    return
  }
  func.func @transform_0(%arg0: i32) -> (i32, i32, i32, i32) {
    %c0_i32 = arith.constant 0 : i32
    %c0_i32_0 = arith.constant 0 : i32
    %c0_i32_1 = arith.constant 0 : i32
    %c0_i32_2 = arith.constant 0 : i32
    return %arg0, %c0_i32, %c0_i32_0, %c0_i32_1 : i32, i32, i32, i32
  }
  func.func @transform_1(%arg0: i32) -> (i32, i32, i32) {
    %c0_i32 = arith.constant 0 : i32
    %c0_i32_0 = arith.constant 0 : i32
    %c0_i32_1 = arith.constant 0 : i32
    return %arg0, %c0_i32, %c0_i32_0 : i32, i32, i32
  }
  func.func @transform_2(%arg0: i32) -> (i32, i32) {
    %c0_i32 = arith.constant 0 : i32
    %c0_i32_0 = arith.constant 0 : i32
    %c0_i32_1 = arith.constant 0 : i32
    return %c0_i32, %c0_i32_0 : i32, i32
  }
  func.func @transform_3(%arg0: i32) -> (i32, i32) {
    %c0_i32 = arith.constant 0 : i32
    %c0_i32_0 = arith.constant 0 : i32
    %c0_i32_1 = arith.constant 0 : i32
    return %c0_i32, %c0_i32_0 : i32, i32
  }
  func.func @transform_4(%arg0: i32) -> (i32, i32) {
    %c0_i32 = arith.constant 0 : i32
    %c0_i32_0 = arith.constant 0 : i32
    %c0_i32_1 = arith.constant 0 : i32
    return %c0_i32, %c0_i32_0 : i32, i32
  }
  func.func @transform_5(%arg0: i32) -> (i32, i32) {
    %c0_i32 = arith.constant 0 : i32
    %c0_i32_0 = arith.constant 0 : i32
    %c0_i32_1 = arith.constant 0 : i32
    return %c0_i32, %c0_i32_0 : i32, i32
  }
  func.func @transform_6(%arg0: i32) -> (i32, i32) {
    %c0_i32 = arith.constant 0 : i32
    %c0_i32_0 = arith.constant 0 : i32
    %c0_i32_1 = arith.constant 0 : i32
    return %c0_i32, %c0_i32_0 : i32, i32
  }
  func.func @transform_7(%arg0: i32) -> (i32, i32) {
    %c0_i32 = arith.constant 0 : i32
    %c0_i32_0 = arith.constant 0 : i32
    %c0_i32_1 = arith.constant 0 : i32
    return %c0_i32, %c0_i32_0 : i32, i32
  }
  func.func @transform_8(%arg0: i32) -> (i32, i32) {
    %c0_i32 = arith.constant 0 : i32
    %c0_i32_0 = arith.constant 0 : i32
    %c0_i32_1 = arith.constant 0 : i32
    return %c0_i32, %c0_i32_0 : i32, i32
  }
  func.func @transform_9(%arg0: i32) -> (i32, i32) {
    %c0_i32 = arith.constant 0 : i32
    %c0_i32_0 = arith.constant 0 : i32
    %c0_i32_1 = arith.constant 0 : i32
    return %c0_i32, %c0_i32_0 : i32, i32
  }
  func.func @transform_10(%arg0: i32) -> (i32, i32) {
    %c0_i32 = arith.constant 0 : i32
    %c0_i32_0 = arith.constant 0 : i32
    %c0_i32_1 = arith.constant 0 : i32
    return %c0_i32, %c0_i32_0 : i32, i32
  }
  func.func @transform_11(%arg0: i32) -> (i32, i32) {
    %c0_i32 = arith.constant 0 : i32
    %c0_i32_0 = arith.constant 0 : i32
    %c0_i32_1 = arith.constant 0 : i32
    return %c0_i32, %c0_i32_0 : i32, i32
  }
  func.func @transform_12(%arg0: i32) -> (i32, i32) {
    %c0_i32 = arith.constant 0 : i32
    %c0_i32_0 = arith.constant 0 : i32
    %c0_i32_1 = arith.constant 0 : i32
    return %c0_i32, %c0_i32_0 : i32, i32
  }
  func.func @transform_13(%arg0: i32) -> (i32, i32) {
    %c0_i32 = arith.constant 0 : i32
    %c0_i32_0 = arith.constant 0 : i32
    %c0_i32_1 = arith.constant 0 : i32
    return %c0_i32, %c0_i32_0 : i32, i32
  }
  func.func @transform_14(%arg0: i32) -> (i32, i32) {
    %c0_i32 = arith.constant 0 : i32
    %c0_i32_0 = arith.constant 0 : i32
    %c0_i32_1 = arith.constant 0 : i32
    return %c0_i32, %c0_i32_0 : i32, i32
  }
  func.func @transform_15(%arg0: i32) -> (i32, i32, i32) {
    %c0_i32 = arith.constant 0 : i32
    %c0_i32_0 = arith.constant 0 : i32
    %c0_i32_1 = arith.constant 0 : i32
    return %arg0, %c0_i32, %c0_i32_0 : i32, i32, i32
  }
  func.func @transform_16(%arg0: i32) -> (i32, i32, i32, i32) {
    %c0_i32 = arith.constant 0 : i32
    %c0_i32_0 = arith.constant 0 : i32
    %c0_i32_1 = arith.constant 0 : i32
    %c0_i32_2 = arith.constant 0 : i32
    return %arg0, %c0_i32, %c0_i32_0, %c0_i32_1 : i32, i32, i32, i32
  }
}

</mosaic_0001>

<llo_original>
// kernel: tpu_custom_call.1
$region0: #{tpu_custom_call.1}
  #allocation0 [shape = 'u32[]', space=smem, size = 0x4, offset = 0x4, fixed_abs, tag = 'smem constant byte address 0x4 - core index']
  #allocation1 [shape = 'u32[72,128]{1,0:T(1,128)}', space=vmem, size = 0x9000, scoped, tag = 'internal scratch']
  %s0 = inlined_call_operand.vmem [shape: f32[2,8,8,4], index: 0, kind: input, shape index: {}]
  %s1 = inlined_call_operand.vmem [shape: f32[2,8,3], index: 1, kind: input, shape index: {}]
  %s2 = inlined_call_operand.vmem [shape: f32[4,8], index: 2, kind: input, shape index: {}]
  %s3 = inlined_call_operand.vmem [shape: f32[15,16], index: 3, kind: input, shape index: {}]
  %s4 = inlined_call_operand.vmem [shape: f32[4,8], index: 4, kind: input, shape index: {}]
  %s5 = inlined_call_operand.vmem [shape: f32[1,8], index: 5, kind: input, shape index: {}]
  %s6 = inlined_call_operand.vmem [shape: f32[8,14], index: 6, kind: input, shape index: {}]
  %s7 = inlined_call_operand.vmem [shape: f32[24,34], index: 7, kind: input, shape index: {}]
  %s8 = inlined_call_operand.vmem [shape: f32[8,14], index: 8, kind: input, shape index: {}]
  %s9 = inlined_call_operand.vmem [shape: f32[1,8], index: 9, kind: input, shape index: {}]
  %s10 = inlined_call_operand.vmem [shape: f32[8,6], index: 10, kind: input, shape index: {}]
  %s11 = inlined_call_operand.vmem [shape: f32[24,18], index: 11, kind: input, shape index: {}]
  %s12 = inlined_call_operand.vmem [shape: f32[8,6], index: 12, kind: input, shape index: {}]
  %s13 = inlined_call_operand.vmem [shape: f32[1,6], index: 13, kind: input, shape index: {}]
  %s14 = inlined_call_operand.vmem [shape: f32[1,6], index: 14, kind: input, shape index: {}]
  %s15 = inlined_call_operand.vmem [shape: f32[2,8,6], index: 15, kind: output, shape index: {0}]
  %s16 = inlined_call_operand.vmem [shape: f32[2,8,8,6], index: 16, kind: output, shape index: {1}]
  %17 = xla_tuple %s15, %s16
  %s18 = sld [smem:[#allocation0]]
  $region101: #{tpu_custom_call.1} parent=0
    _
  %s20 = ssub.s32 1, %s18
  %s21 = scalar_select 0, %s20, %s18
  loop: start=0, step=1, limit=4
  $region2: #{tpu_custom_call.1} parent=0 // loop_pre_header
    _
  $region3: #{tpu_custom_call.1} parent=0 // loop_header
    %s23 = sphi 0, %s27
    %p24 = scmp.ge.s32.totalorder %s23, 4
    %s33 = sphi 0, %s35
    %s36 = sphi 0, %s33
    %s37 = sphi 0, %s36
    %s53 = sphi 0, %s37
    %s59 = sphi 0, %s61
    %s62 = sphi 0, %s59
    %s63 = sphi 0, %s62
    %s79 = sphi 0, %s63
    %s83 = sphi 0, %s83
    %s85 = sphi 0, %s83
    %s86 = sphi 0, %s85
    %s100 = sphi 0, %s86
    %s104 = sphi 0, %s104
    %s106 = sphi 0, %s104
    %s107 = sphi 0, %s106
    %s121 = sphi 0, %s107
    %s125 = sphi 0, %s125
    %s127 = sphi 0, %s125
    %s128 = sphi 0, %s127
    %s142 = sphi 0, %s128
    %s146 = sphi 0, %s146
    %s148 = sphi 0, %s146
    %s149 = sphi 0, %s148
    %s163 = sphi 0, %s149
    %s167 = sphi 0, %s167
    %s169 = sphi 0, %s167
    %s170 = sphi 0, %s169
    %s184 = sphi 0, %s170
    %s188 = sphi 0, %s188
    %s190 = sphi 0, %s188
    %s191 = sphi 0, %s190
    %s205 = sphi 0, %s191
    %s209 = sphi 0, %s209
    %s211 = sphi 0, %s209
    %s212 = sphi 0, %s211
    %s226 = sphi 0, %s212
    %s230 = sphi 0, %s230
    %s232 = sphi 0, %s230
    %s233 = sphi 0, %s232
    %s247 = sphi 0, %s233
    %s251 = sphi 0, %s251
    %s253 = sphi 0, %s251
    %s254 = sphi 0, %s253
    %s268 = sphi 0, %s254
    %s272 = sphi 0, %s272
    %s274 = sphi 0, %s272
    %s275 = sphi 0, %s274
    %s289 = sphi 0, %s275
    %s293 = sphi 0, %s293
    %s295 = sphi 0, %s293
    %s296 = sphi 0, %s295
    %s310 = sphi 0, %s296
    %s314 = sphi 0, %s314
    %s316 = sphi 0, %s314
    %s317 = sphi 0, %s316
    %s331 = sphi 0, %s317
    %s335 = sphi 0, %s335
    %s337 = sphi 0, %s335
    %s338 = sphi 0, %s337
    %s352 = sphi 0, %s338
    %s358 = sphi 0, %s360
    %s361 = sphi 0, %s358
    %s362 = sphi 0, %s361
    %s378 = sphi 0, %s362
    %s384 = sphi 0, %s386
    %s387 = sphi 0, %s384
    %s388 = sphi 0, %s387
    %s404 = sphi 0, %s388
  $region4: #{tpu_custom_call.1} parent=0 // loop_header_branch
    %26 = sbr.rel (%p24) target = $region8
  $region5: #{tpu_custom_call.1} parent=0 // loop_body
    %s28 = ssub.s32 %s23, 1
    %s29 = ssub.s32 %s23, 2
    %s30 = sadd.s32 %s23, 1
    %s31 = ssub.s32 %s23, %s30
    %p32 = scmp.eq.s32.totalorder %s31, 0
    %s34 = sadd.s32 %s33, 1
    %s35 = scalar_select %p32, %s33, %s34
    %p38 = pneg %p32
    %p39 = scmp.eq.s32.totalorder %s23, 1
    %p40 = por %p38, %p39
    %p41 = scmp.ne.s32.totalorder %s33, %s36
    %p42 = scmp.eq.s32.totalorder %s23, 0
    %p43 = por %p41, %p42
    %p44 = scmp.ne.s32.totalorder %s33, %s36
    %p45 = scmp.eq.s32.totalorder %s28, 1
    %p46 = por %p44, %p45
    %p47 = scmp.ne.s32.totalorder %s36, %s37
    %p48 = scmp.eq.s32.totalorder %s28, 0
    %p49 = por %p47, %p48
    %p50 = scmp.ne.s32.totalorder %s36, %s37
    %p51 = scmp.eq.s32.totalorder %s29, 1
    %p52 = por %p50, %p51
    %p54 = scmp.ne.s32.totalorder %s37, %s53
    %p55 = scmp.eq.s32.totalorder %s29, 0
    %p56 = por %p54, %p55
    %s57 = ssub.s32 %s23, %s30
    %p58 = scmp.eq.s32.totalorder %s57, 0
    %s60 = sadd.s32 %s59, 1
    %s61 = scalar_select %p58, %s59, %s60
    %p64 = pneg %p58
    %p65 = scmp.eq.s32.totalorder %s23, 1
    %p66 = por %p64, %p65
    %p67 = scmp.ne.s32.totalorder %s59, %s62
    %p68 = scmp.eq.s32.totalorder %s23, 0
    %p69 = por %p67, %p68
    %p70 = scmp.ne.s32.totalorder %s59, %s62
    %p71 = scmp.eq.s32.totalorder %s28, 1
    %p72 = por %p70, %p71
    %p73 = scmp.ne.s32.totalorder %s62, %s63
    %p74 = scmp.eq.s32.totalorder %s28, 0
    %p75 = por %p73, %p74
    %p76 = scmp.ne.s32.totalorder %s62, %s63
    %p77 = scmp.eq.s32.totalorder %s29, 1
    %p78 = por %p76, %p77
    %p80 = scmp.ne.s32.totalorder %s63, %s79
    %p81 = scmp.eq.s32.totalorder %s29, 0
    %p82 = por %p80, %p81
    %s84 = sadd.s32 %s83, 1
    %p87 = scmp.eq.s32.totalorder %s23, 1
    %p88 = scmp.ne.s32.totalorder %s83, %s85
    %p89 = scmp.eq.s32.totalorder %s23, 0
    %p90 = por %p88, %p89
    %p91 = scmp.ne.s32.totalorder %s83, %s85
    %p92 = scmp.eq.s32.totalorder %s28, 1
    %p93 = por %p91, %p92
    %p94 = scmp.ne.s32.totalorder %s85, %s86
    %p95 = scmp.eq.s32.totalorder %s28, 0
    %p96 = por %p94, %p95
    %p97 = scmp.ne.s32.totalorder %s85, %s86
    %p98 = scmp.eq.s32.totalorder %s29, 1
    %p99 = por %p97, %p98
    %p101 = scmp.ne.s32.totalorder %s86, %s100
    %p102 = scmp.eq.s32.totalorder %s29, 0
    %p103 = por %p101, %p102
    %s105 = sadd.s32 %s104, 1
    %p108 = scmp.eq.s32.totalorder %s23, 1
    %p109 = scmp.ne.s32.totalorder %s104, %s106
    %p110 = scmp.eq.s32.totalorder %s23, 0
    %p111 = por %p109, %p110
    %p112 = scmp.ne.s32.totalorder %s104, %s106
    %p113 = scmp.eq.s32.totalorder %s28, 1
    %p114 = por %p112, %p113
    %p115 = scmp.ne.s32.totalorder %s106, %s107
    %p116 = scmp.eq.s32.totalorder %s28, 0
    %p117 = por %p115, %p116
    %p118 = scmp.ne.s32.totalorder %s106, %s107
    %p119 = scmp.eq.s32.totalorder %s29, 1
    %p120 = por %p118, %p119
    %p122 = scmp.ne.s32.totalorder %s107, %s121
    %p123 = scmp.eq.s32.totalorder %s29, 0
    %p124 = por %p122, %p123
    %s126 = sadd.s32 %s125, 1
    %p129 = scmp.eq.s32.totalorder %s23, 1
    %p130 = scmp.ne.s32.totalorder %s125, %s127
    %p131 = scmp.eq.s32.totalorder %s23, 0
    %p132 = por %p130, %p131
    %p133 = scmp.ne.s32.totalorder %s125, %s127
    %p134 = scmp.eq.s32.totalorder %s28, 1
    %p135 = por %p133, %p134
    %p136 = scmp.ne.s32.totalorder %s127, %s128
    %p137 = scmp.eq.s32.totalorder %s28, 0
    %p138 = por %p136, %p137
    %p139 = scmp.ne.s32.totalorder %s127, %s128
    %p140 = scmp.eq.s32.totalorder %s29, 1
    %p141 = por %p139, %p140
    %p143 = scmp.ne.s32.totalorder %s128, %s142
    %p144 = scmp.eq.s32.totalorder %s29, 0
    %p145 = por %p143, %p144
    %s147 = sadd.s32 %s146, 1
    %p150 = scmp.eq.s32.totalorder %s23, 1
    %p151 = scmp.ne.s32.totalorder %s146, %s148
    %p152 = scmp.eq.s32.totalorder %s23, 0
    %p153 = por %p151, %p152
    %p154 = scmp.ne.s32.totalorder %s146, %s148
    %p155 = scmp.eq.s32.totalorder %s28, 1
    %p156 = por %p154, %p155
    %p157 = scmp.ne.s32.totalorder %s148, %s149
    %p158 = scmp.eq.s32.totalorder %s28, 0
    %p159 = por %p157, %p158
    %p160 = scmp.ne.s32.totalorder %s148, %s149
    %p161 = scmp.eq.s32.totalorder %s29, 1
    %p162 = por %p160, %p161
    %p164 = scmp.ne.s32.totalorder %s149, %s163
    %p165 = scmp.eq.s32.totalorder %s29, 0
    %p166 = por %p164, %p165
    %s168 = sadd.s32 %s167, 1
    %p171 = scmp.eq.s32.totalorder %s23, 1
    %p172 = scmp.ne.s32.totalorder %s167, %s169
    %p173 = scmp.eq.s32.totalorder %s23, 0
    %p174 = por %p172, %p173
    %p175 = scmp.ne.s32.totalorder %s167, %s169
    %p176 = scmp.eq.s32.totalorder %s28, 1
    %p177 = por %p175, %p176
    %p178 = scmp.ne.s32.totalorder %s169, %s170
    %p179 = scmp.eq.s32.totalorder %s28, 0
    %p180 = por %p178, %p179
    %p181 = scmp.ne.s32.totalorder %s169, %s170
    %p182 = scmp.eq.s32.totalorder %s29, 1
    %p183 = por %p181, %p182
    %p185 = scmp.ne.s32.totalorder %s170, %s184
    %p186 = scmp.eq.s32.totalorder %s29, 0
    %p187 = por %p185, %p186
    %s189 = sadd.s32 %s188, 1
    %p192 = scmp.eq.s32.totalorder %s23, 1
    %p193 = scmp.ne.s32.totalorder %s188, %s190
    %p194 = scmp.eq.s32.totalorder %s23, 0
    %p195 = por %p193, %p194
    %p196 = scmp.ne.s32.totalorder %s188, %s190
    %p197 = scmp.eq.s32.totalorder %s28, 1
    %p198 = por %p196, %p197
    %p199 = scmp.ne.s32.totalorder %s190, %s191
    %p200 = scmp.eq.s32.totalorder %s28, 0
    %p201 = por %p199, %p200
    %p202 = scmp.ne.s32.totalorder %s190, %s191
    %p203 = scmp.eq.s32.totalorder %s29, 1
    %p204 = por %p202, %p203
    %p206 = scmp.ne.s32.totalorder %s191, %s205
    %p207 = scmp.eq.s32.totalorder %s29, 0
    %p208 = por %p206, %p207
    %s210 = sadd.s32 %s209, 1
    %p213 = scmp.eq.s32.totalorder %s23, 1
    %p214 = scmp.ne.s32.totalorder %s209, %s211
    %p215 = scmp.eq.s32.totalorder %s23, 0
    %p216 = por %p214, %p215
    %p217 = scmp.ne.s32.totalorder %s209, %s211
    %p218 = scmp.eq.s32.totalorder %s28, 1
    %p219 = por %p217, %p218
    %p220 = scmp.ne.s32.totalorder %s211, %s212
    %p221 = scmp.eq.s32.totalorder %s28, 0
    %p222 = por %p220, %p221
    %p223 = scmp.ne.s32.totalorder %s211, %s212
    %p224 = scmp.eq.s32.totalorder %s29, 1
    %p225 = por %p223, %p224
    %p227 = scmp.ne.s32.totalorder %s212, %s226
    %p228 = scmp.eq.s32.totalorder %s29, 0
    %p229 = por %p227, %p228
    %s231 = sadd.s32 %s230, 1
    %p234 = scmp.eq.s32.totalorder %s23, 1
    %p235 = scmp.ne.s32.totalorder %s230, %s232
    %p236 = scmp.eq.s32.totalorder %s23, 0
    %p237 = por %p235, %p236
    %p238 = scmp.ne.s32.totalorder %s230, %s232
    %p239 = scmp.eq.s32.totalorder %s28, 1
    %p240 = por %p238, %p239
    %p241 = scmp.ne.s32.totalorder %s232, %s233
    %p242 = scmp.eq.s32.totalorder %s28, 0
    %p243 = por %p241, %p242
    %p244 = scmp.ne.s32.totalorder %s232, %s233
    %p245 = scmp.eq.s32.totalorder %s29, 1
    %p246 = por %p244, %p245
    %p248 = scmp.ne.s32.totalorder %s233, %s247
    %p249 = scmp.eq.s32.totalorder %s29, 0
    %p250 = por %p248, %p249
    %s252 = sadd.s32 %s251, 1
    %p255 = scmp.eq.s32.totalorder %s23, 1
    %p256 = scmp.ne.s32.totalorder %s251, %s253
    %p257 = scmp.eq.s32.totalorder %s23, 0
    %p258 = por %p256, %p257
    %p259 = scmp.ne.s32.totalorder %s251, %s253
    %p260 = scmp.eq.s32.totalorder %s28, 1
    %p261 = por %p259, %p260
    %p262 = scmp.ne.s32.totalorder %s253, %s254
    %p263 = scmp.eq.s32.totalorder %s28, 0
    %p264 = por %p262, %p263
    %p265 = scmp.ne.s32.totalorder %s253, %s254
    %p266 = scmp.eq.s32.totalorder %s29, 1
    %p267 = por %p265, %p266
    %p269 = scmp.ne.s32.totalorder %s254, %s268
    %p270 = scmp.eq.s32.totalorder %s29, 0
    %p271 = por %p269, %p270
    %s273 = sadd.s32 %s272, 1
    %p276 = scmp.eq.s32.totalorder %s23, 1
    %p277 = scmp.ne.s32.totalorder %s272, %s274
    %p278 = scmp.eq.s32.totalorder %s23, 0
    %p279 = por %p277, %p278
    %p280 = scmp.ne.s32.totalorder %s272, %s274
    %p281 = scmp.eq.s32.totalorder %s28, 1
    %p282 = por %p280, %p281
    %p283 = scmp.ne.s32.totalorder %s274, %s275
    %p284 = scmp.eq.s32.totalorder %s28, 0
    %p285 = por %p283, %p284
    %p286 = scmp.ne.s32.totalorder %s274, %s275
    %p287 = scmp.eq.s32.totalorder %s29, 1
    %p288 = por %p286, %p287
    %p290 = scmp.ne.s32.totalorder %s275, %s289
    %p291 = scmp.eq.s32.totalorder %s29, 0
    %p292 = por %p290, %p291
    %s294 = sadd.s32 %s293, 1
    %p297 = scmp.eq.s32.totalorder %s23, 1
    %p298 = scmp.ne.s32.totalorder %s293, %s295
    %p299 = scmp.eq.s32.totalorder %s23, 0
    %p300 = por %p298, %p299
    %p301 = scmp.ne.s32.totalorder %s293, %s295
    %p302 = scmp.eq.s32.totalorder %s28, 1
    %p303 = por %p301, %p302
    %p304 = scmp.ne.s32.totalorder %s295, %s296
    %p305 = scmp.eq.s32.totalorder %s28, 0
    %p306 = por %p304, %p305
    %p307 = scmp.ne.s32.totalorder %s295, %s296
    %p308 = scmp.eq.s32.totalorder %s29, 1
    %p309 = por %p307, %p308
    %p311 = scmp.ne.s32.totalorder %s296, %s310
    %p312 = scmp.eq.s32.totalorder %s29, 0
    %p313 = por %p311, %p312
    %s315 = sadd.s32 %s314, 1
    %p318 = scmp.eq.s32.totalorder %s23, 1
    %p319 = scmp.ne.s32.totalorder %s314, %s316
    %p320 = scmp.eq.s32.totalorder %s23, 0
    %p321 = por %p319, %p320
    %p322 = scmp.ne.s32.totalorder %s314, %s316
    %p323 = scmp.eq.s32.totalorder %s28, 1
    %p324 = por %p322, %p323
    %p325 = scmp.ne.s32.totalorder %s316, %s317
    %p326 = scmp.eq.s32.totalorder %s28, 0
    %p327 = por %p325, %p326
    %p328 = scmp.ne.s32.totalorder %s316, %s317
    %p329 = scmp.eq.s32.totalorder %s29, 1
    %p330 = por %p328, %p329
    %p332 = scmp.ne.s32.totalorder %s317, %s331
    %p333 = scmp.eq.s32.totalorder %s29, 0
    %p334 = por %p332, %p333
    %s336 = sadd.s32 %s335, 1
    %p339 = scmp.eq.s32.totalorder %s23, 1
    %p340 = scmp.ne.s32.totalorder %s335, %s337
    %p341 = scmp.eq.s32.totalorder %s23, 0
    %p342 = por %p340, %p341
    %p343 = scmp.ne.s32.totalorder %s335, %s337
    %p344 = scmp.eq.s32.totalorder %s28, 1
    %p345 = por %p343, %p344
    %p346 = scmp.ne.s32.totalorder %s337, %s338
    %p347 = scmp.eq.s32.totalorder %s28, 0
    %p348 = por %p346, %p347
    %p349 = scmp.ne.s32.totalorder %s337, %s338
    %p350 = scmp.eq.s32.totalorder %s29, 1
    %p351 = por %p349, %p350
    %p353 = scmp.ne.s32.totalorder %s338, %s352
    %p354 = scmp.eq.s32.totalorder %s29, 0
    %p355 = por %p353, %p354
    %s356 = ssub.s32 %s23, %s30
    %p357 = scmp.eq.s32.totalorder %s356, 0
    %s359 = sadd.s32 %s358, 1
    %s360 = scalar_select %p357, %s358, %s359
    %p363 = pneg %p357
    %p364 = scmp.eq.s32.totalorder %s23, 1
    %p365 = por %p363, %p364
    %p366 = scmp.ne.s32.totalorder %s358, %s361
    %p367 = scmp.eq.s32.totalorder %s23, 0
    %p368 = por %p366, %p367
    %p369 = scmp.ne.s32.totalorder %s358, %s361
    %p370 = scmp.eq.s32.totalorder %s28, 1
    %p371 = por %p369, %p370
    %p372 = scmp.ne.s32.totalorder %s361, %s362
    %p373 = scmp.eq.s32.totalorder %s28, 0
    %p374 = por %p372, %p373
    %p375 = scmp.ne.s32.totalorder %s361, %s362
    %p376 = scmp.eq.s32.totalorder %s29, 1
    %p377 = por %p375, %p376
    %p379 = scmp.ne.s32.totalorder %s362, %s378
    %p380 = scmp.eq.s32.totalorder %s29, 0
    %p381 = por %p379, %p380
    %s382 = ssub.s32 %s23, %s30
    %p383 = scmp.eq.s32.totalorder %s382, 0
    %s385 = sadd.s32 %s384, 1
    %s386 = scalar_select %p383, %s384, %s385
    %p389 = pneg %p383
    %p390 = scmp.eq.s32.totalorder %s23, 1
    %p391 = por %p389, %p390
    %p392 = scmp.ne.s32.totalorder %s384, %s387
    %p393 = scmp.eq.s32.totalorder %s23, 0
    %p394 = por %p392, %p393
    %p395 = scmp.ne.s32.totalorder %s384, %s387
    %p396 = scmp.eq.s32.totalorder %s28, 1
    %p397 = por %p395, %p396
    %p398 = scmp.ne.s32.totalorder %s387, %s388
    %p399 = scmp.eq.s32.totalorder %s28, 0
    %p400 = por %p398, %p399
    %p401 = scmp.ne.s32.totalorder %s387, %s388
    %p402 = scmp.eq.s32.totalorder %s29, 1
    %p403 = por %p401, %p402
    %p405 = scmp.ne.s32.totalorder %s388, %s404
    %p406 = scmp.eq.s32.totalorder %s29, 0
    %p407 = por %p405, %p406
    %p408 = scmp.le.s32.totalorder 1, %s23
    %p409 = scmp.lt.s32.totalorder %s23, 3
    %p410 = pnand %p408, %p409
    %p411 = pneg %p410
    // Predicated region
    $region9: #{tpu_custom_call.1} parent=5 // pred_check
      _
    $region10: #{tpu_custom_call.1} parent=5 // pred_check_branch
      %413 = sbr.rel (%p410) target = $region12
    $region11: #{tpu_custom_call.1} parent=5 // pred_region
      %s414 = ssub.s32 %s23, 1
      // Predicated region
      $region13: #{tpu_custom_call.1} parent=11 // pred_check
        %p415 = pneg %p96
      $region14: #{tpu_custom_call.1} parent=11 // pred_check_branch
        %417 = sbr.rel (%p415) target = $region16
      $region15: #{tpu_custom_call.1} parent=11 // pred_region
        _
      $region16: #{tpu_custom_call.1} parent=11 // pred_fallthru
        _
      // Predicated region
      $region17: #{tpu_custom_call.1} parent=11 // pred_check
        %p418 = pneg %p117
      $region18: #{tpu_custom_call.1} parent=11 // pred_check_branch
        %420 = sbr.rel (%p418) target = $region20
      $region19: #{tpu_custom_call.1} parent=11 // pred_region
        _
      $region20: #{tpu_custom_call.1} parent=11 // pred_fallthru
        _
      // Predicated region
      $region21: #{tpu_custom_call.1} parent=11 // pred_check
        %p421 = pneg %p138
      $region22: #{tpu_custom_call.1} parent=11 // pred_check_branch
        %423 = sbr.rel (%p421) target = $region24
      $region23: #{tpu_custom_call.1} parent=11 // pred_region
        _
      $region24: #{tpu_custom_call.1} parent=11 // pred_fallthru
        _
      // Predicated region
      $region25: #{tpu_custom_call.1} parent=11 // pred_check
        %p424 = pneg %p159
      $region26: #{tpu_custom_call.1} parent=11 // pred_check_branch
        %426 = sbr.rel (%p424) target = $region28
      $region27: #{tpu_custom_call.1} parent=11 // pred_region
        _
      $region28: #{tpu_custom_call.1} parent=11 // pred_fallthru
        _
      // Predicated region
      $region29: #{tpu_custom_call.1} parent=11 // pred_check
        %p427 = pneg %p180
      $region30: #{tpu_custom_call.1} parent=11 // pred_check_branch
        %429 = sbr.rel (%p427) target = $region32
      $region31: #{tpu_custom_call.1} parent=11 // pred_region
        _
      $region32: #{tpu_custom_call.1} parent=11 // pred_fallthru
        _
      // Predicated region
      $region33: #{tpu_custom_call.1} parent=11 // pred_check
        %p430 = pneg %p201
      $region34: #{tpu_custom_call.1} parent=11 // pred_check_branch
        %432 = sbr.rel (%p430) target = $region36
      $region35: #{tpu_custom_call.1} parent=11 // pred_region
        _
      $region36: #{tpu_custom_call.1} parent=11 // pred_fallthru
        _
      // Predicated region
      $region37: #{tpu_custom_call.1} parent=11 // pred_check
        %p433 = pneg %p222
      $region38: #{tpu_custom_call.1} parent=11 // pred_check_branch
        %435 = sbr.rel (%p433) target = $region40
      $region39: #{tpu_custom_call.1} parent=11 // pred_region
        _
      $region40: #{tpu_custom_call.1} parent=11 // pred_fallthru
        _
      // Predicated region
      $region41: #{tpu_custom_call.1} parent=11 // pred_check
        %p436 = pneg %p243
      $region42: #{tpu_custom_call.1} parent=11 // pred_check_branch
        %438 = sbr.rel (%p436) target = $region44
      $region43: #{tpu_custom_call.1} parent=11 // pred_region
        _
      $region44: #{tpu_custom_call.1} parent=11 // pred_fallthru
        _
      // Predicated region
      $region45: #{tpu_custom_call.1} parent=11 // pred_check
        %p439 = pneg %p264
      $region46: #{tpu_custom_call.1} parent=11 // pred_check_branch
        %441 = sbr.rel (%p439) target = $region48
      $region47: #{tpu_custom_call.1} parent=11 // pred_region
        _
      $region48: #{tpu_custom_call.1} parent=11 // pred_fallthru
        _
      // Predicated region
      $region49: #{tpu_custom_call.1} parent=11 // pred_check
        %p442 = pneg %p285
      $region50: #{tpu_custom_call.1} parent=11 // pred_check_branch
        %444 = sbr.rel (%p442) target = $region52
      $region51: #{tpu_custom_call.1} parent=11 // pred_region
        _
      $region52: #{tpu_custom_call.1} parent=11 // pred_fallthru
        _
      // Predicated region
      $region53: #{tpu_custom_call.1} parent=11 // pred_check
        %p445 = pneg %p306
      $region54: #{tpu_custom_call.1} parent=11 // pred_check_branch
        %447 = sbr.rel (%p445) target = $region56
      $region55: #{tpu_custom_call.1} parent=11 // pred_region
        _
      $region56: #{tpu_custom_call.1} parent=11 // pred_fallthru
        _
      // Predicated region
      $region57: #{tpu_custom_call.1} parent=11 // pred_check
        %p448 = pneg %p327
      $region58: #{tpu_custom_call.1} parent=11 // pred_check_branch
        %450 = sbr.rel (%p448) target = $region60
      $region59: #{tpu_custom_call.1} parent=11 // pred_region
        _
      $region60: #{tpu_custom_call.1} parent=11 // pred_fallthru
        _
      // Predicated region
      $region61: #{tpu_custom_call.1} parent=11 // pred_check
        %p451 = pneg %p348
      $region62: #{tpu_custom_call.1} parent=11 // pred_check_branch
        %453 = sbr.rel (%p451) target = $region64
      $region63: #{tpu_custom_call.1} parent=11 // pred_region
        _
      $region64: #{tpu_custom_call.1} parent=11 // pred_fallthru
        _
    $region12: #{tpu_custom_call.1} parent=5 // pred_fallthru
      _
    %p454 = scmp.lt.s32.totalorder %s23, 2
    // Predicated region
    $region65: #{tpu_custom_call.1} parent=5 // pred_check
      %p455 = pneg %p454
    $region66: #{tpu_custom_call.1} parent=5 // pred_check_branch
      %457 = sbr.rel (%p455) target = $region68
    $region67: #{tpu_custom_call.1} parent=5 // pred_region
      // Predicated region
      $region69: #{tpu_custom_call.1} parent=67 // pred_check
        %p458 = pneg %p43
      $region70: #{tpu_custom_call.1} parent=67 // pred_check_branch
        %460 = sbr.rel (%p458) target = $region72
      $region71: #{tpu_custom_call.1} parent=67 // pred_region
        %p461 = scmp.lt.s32.totalorder %s23, 1
        %s462 = scalar_select %p461, %s23, 1
        %s463 = smul.addr %s462, 8
        %s464 = smul.addr %s463, 8
        %s465 = scalar_lea.vmem %s0, %s464
      $region72: #{tpu_custom_call.1} parent=67 // pred_fallthru
        _
      // Predicated region
      $region73: #{tpu_custom_call.1} parent=67 // pred_check
        %p466 = pneg %p69
      $region74: #{tpu_custom_call.1} parent=67 // pred_check_branch
        %468 = sbr.rel (%p466) target = $region76
      $region75: #{tpu_custom_call.1} parent=67 // pred_region
        %p469 = scmp.lt.s32.totalorder %s23, 1
        %s470 = scalar_select %p469, %s23, 1
        %s471 = smul.addr %s470, 8
        %s472 = scalar_lea.vmem %s1, %s471
      $region76: #{tpu_custom_call.1} parent=67 // pred_fallthru
        _
    $region68: #{tpu_custom_call.1} parent=5 // pred_fallthru
      _
    %p473 = scmp.le.s32.totalorder 1, %s23
    %p474 = scmp.lt.s32.totalorder %s23, 3
    %p475 = pnand %p473, %p474
    %p476 = pneg %p475
    // Predicated region
    $region77: #{tpu_custom_call.1} parent=5 // pred_check
      _
    $region78: #{tpu_custom_call.1} parent=5 // pred_check_branch
      %478 = sbr.rel (%p475) target = $region80
    $region79: #{tpu_custom_call.1} parent=5 // pred_region
      %s479 = ssub.s32 %s23, 1
      %p480 = scmp.lt.s32.totalorder %s28, 1
      %s481 = scalar_select %p480, %s28, 1
      %s482 = smul.addr %s481, 8
      %s483 = smul.addr %s482, 8
      %s484 = scalar_lea.vmem %s0, %s483
      %p485 = pneg %p49
      %p486 = pneg %p46
      %p487 = scmp.lt.s32.totalorder %s28, 1
      %s488 = scalar_select %p487, %s28, 1
      %s489 = smul.addr %s488, 8
      %s490 = scalar_lea.vmem %s1, %s489
      %p491 = pneg %p75
      %p492 = pneg %p72
      %p493 = pneg %p96
      %p494 = pneg %p93
      %p495 = pneg %p117
      %p496 = pneg %p114
      %p497 = pneg %p138
      %p498 = pneg %p135
      %p499 = pneg %p159
      %p500 = pneg %p156
      %p501 = pneg %p180
      %p502 = pneg %p177
      %p503 = pneg %p201
      %p504 = pneg %p198
      %p505 = pneg %p222
      %p506 = pneg %p219
      %p507 = pneg %p243
      %p508 = pneg %p240
      %p509 = pneg %p264
      %p510 = pneg %p261
      %p511 = pneg %p285
      %p512 = pneg %p282
      %p513 = pneg %p306
      %p514 = pneg %p303
      %p515 = pneg %p327
      %p516 = pneg %p324
      %p517 = pneg %p348
      %p518 = pneg %p345
      %p519 = pneg %p374
      %p520 = pneg %p371
      %p521 = scmp.lt.s32.totalorder %s28, 1
      %s522 = scalar_select %p521, %s28, 1
      %s523 = smul.addr %s522, 8
      %s524 = scalar_lea.vmem %s15, %s523
      %p525 = pneg %p400
      %p526 = pneg %p397
      %p527 = scmp.lt.s32.totalorder %s28, 1
      %s528 = scalar_select %p527, %s28, 1
      %s529 = smul.addr %s528, 8
      %s530 = smul.addr %s529, 8
      %s531 = scalar_lea.vmem %s16, %s530
      %p532 = scmp.lt.s32.totalorder %s28, 1
      %s533 = scalar_select %p532, %s28, 1
      %s534 = smul.addr %s533, 8
      %s535 = smul.addr %s534, 8
      %s536 = scalar_lea.vmem %s0, %s535
      %p537 = scmp.lt.s32.totalorder %s28, 1
      %s538 = scalar_select %p537, %s28, 1
      %s539 = smul.addr %s538, 8
      %s540 = scalar_lea.vmem %s1, %s539
      %p541 = scmp.lt.s32.totalorder %s28, 1
      %s542 = scalar_select %p541, %s28, 1
      %s543 = smul.addr %s542, 8
      %s544 = scalar_lea.vmem %s15, %s543
      %p545 = scmp.lt.s32.totalorder %s28, 1
      %s546 = scalar_select %p545, %s28, 1
      %s547 = smul.addr %s546, 8
      %s548 = smul.addr %s547, 8
      %s549 = scalar_lea.vmem %s16, %s548
      %v550 = vld [vmem:[%s536] sm:$0xff]
      %v551 = vld [vmem:[%s536 + $0x8] sm:$0xff]
      %v552 = vld [vmem:[%s536 + $0x10] sm:$0xff]
      %v553 = vld [vmem:[%s536 + $0x18] sm:$0xff]
      %v554 = vld [vmem:[%s536 + $0x20] sm:$0xff]
      %v555 = vld [vmem:[%s536 + $0x28] sm:$0xff]
      %v556 = vld [vmem:[%s536 + $0x30] sm:$0xff]
      %v557 = vld [vmem:[%s536 + $0x38] sm:$0xff]
      %v558 = vlaneseq
      %v559 = vshrl.u32 %v558, 7
      %v560 = vlaneseq
      %v561 = vand.u32 %v560, 127
      %vm562 = vcmp.eq.s32.totalorder %v559, %v561
      %v563 = vsel %vm562, 1, 0
      %v564 = vcvt.s32.f32 %v563
      %v565 = vperm.slane %v564, 0
      %v566 = vlaneseq
      %v567 = vshrl.u32 %v566, 7
      %569 = vset.pattern.permute.xlu0 %v567
      %570 = vperm.xlu0 %569, %v565
      %v571 = vpop.permute.xlu0 %570
      %v572 = vperm.slane %v564, 1
      %v573 = vlaneseq
      %v574 = vshrl.u32 %v573, 7
      %576 = vset.pattern.permute.xlu0 %v574
      %577 = vperm.xlu0 %576, %v572
      %v578 = vpop.permute.xlu0 %577
      %v579 = vperm.slane %v564, 2
      %v580 = vlaneseq
      %v581 = vshrl.u32 %v580, 7
      %583 = vset.pattern.permute.xlu0 %v581
      %584 = vperm.xlu0 %583, %v579
      %v585 = vpop.permute.xlu0 %584
      %v586 = vperm.slane %v564, 3
      %v587 = vlaneseq
      %v588 = vshrl.u32 %v587, 7
      %590 = vset.pattern.permute.xlu0 %v588
      %591 = vperm.xlu0 %590, %v586
      %v592 = vpop.permute.xlu0 %591
      %v593 = vperm.slane %v564, 4
      %v594 = vlaneseq
      %v595 = vshrl.u32 %v594, 7
      %597 = vset.pattern.permute.xlu0 %v595
      %598 = vperm.xlu0 %597, %v593
      %v599 = vpop.permute.xlu0 %598
      %v600 = vperm.slane %v564, 5
      %v601 = vlaneseq
      %v602 = vshrl.u32 %v601, 7
      %604 = vset.pattern.permute.xlu0 %v602
      %605 = vperm.xlu0 %604, %v600
      %v606 = vpop.permute.xlu0 %605
      %v607 = vperm.slane %v564, 6
      %v608 = vlaneseq
      %v609 = vshrl.u32 %v608, 7
      %611 = vset.pattern.permute.xlu0 %v609
      %612 = vperm.xlu0 %611, %v607
      %v613 = vpop.permute.xlu0 %612
      %v614 = vperm.slane %v564, 7
      %v615 = vlaneseq
      %v616 = vshrl.u32 %v615, 7
      %618 = vset.pattern.permute.xlu0 %v616
      %619 = vperm.xlu0 %618, %v614
      %v620 = vpop.permute.xlu0 %619
      %vm621 = vcmask 31744
      %v622 = vsel %vm621, %v550, 0.0
      %v623 = vsel %vm621, %v551, 0.0
      %v624 = vadd.f32 %v622, %v623
      %v625 = vsel %vm621, %v552, 0.0
      %v626 = vadd.f32 %v624, %v625
      %v627 = vsel %vm621, %v553, 0.0
      %v628 = vadd.f32 %v626, %v627
      %v629 = vsel %vm621, %v554, 0.0
      %v630 = vadd.f32 %v628, %v629
      %v631 = vsel %vm621, %v555, 0.0
      %v632 = vadd.f32 %v630, %v631
      %v633 = vsel %vm621, %v556, 0.0
      %v634 = vadd.f32 %v632, %v633
      %v635 = vsel %vm621, %v557, 0.0
      %v636 = vadd.f32 %v634, %v635
      %v637 = vrot.slane %v622, 4
      %v638 = vadd.f32 %v622, %v637
      %v639 = vrot.slane %v638, 2
      %v640 = vadd.f32 %v638, %v639
      %v641 = vrot.slane %v640, 1
      %v642 = vadd.f32 %v640, %v641
      %v643 = vrot.slane %v623, 4
      %v644 = vadd.f32 %v623, %v643
      %v645 = vrot.slane %v644, 2
      %v646 = vadd.f32 %v644, %v645
      %v647 = vrot.slane %v646, 1
      %v648 = vadd.f32 %v646, %v647
      %v649 = vrot.slane %v625, 4
      %v650 = vadd.f32 %v625, %v649
      %v651 = vrot.slane %v650, 2
      %v652 = vadd.f32 %v650, %v651
      %v653 = vrot.slane %v652, 1
      %v654 = vadd.f32 %v652, %v653
      %v655 = vrot.slane %v627, 4
      %v656 = vadd.f32 %v627, %v655
      %v657 = vrot.slane %v656, 2
      %v658 = vadd.f32 %v656, %v657
      %v659 = vrot.slane %v658, 1
      %v660 = vadd.f32 %v658, %v659
      %v661 = vrot.slane %v629, 4
      %v662 = vadd.f32 %v629, %v661
      %v663 = vrot.slane %v662, 2
      %v664 = vadd.f32 %v662, %v663
      %v665 = vrot.slane %v664, 1
      %v666 = vadd.f32 %v664, %v665
      %v667 = vrot.slane %v631, 4
      %v668 = vadd.f32 %v631, %v667
      %v669 = vrot.slane %v668, 2
      %v670 = vadd.f32 %v668, %v669
      %v671 = vrot.slane %v670, 1
      %v672 = vadd.f32 %v670, %v671
      %v673 = vrot.slane %v633, 4
      %v674 = vadd.f32 %v633, %v673
      %v675 = vrot.slane %v674, 2
      %v676 = vadd.f32 %v674, %v675
      %v677 = vrot.slane %v676, 1
      %v678 = vadd.f32 %v676, %v677
      %v679 = vrot.slane %v635, 4
      %v680 = vadd.f32 %v635, %v679
      %v681 = vrot.slane %v680, 2
      %v682 = vadd.f32 %v680, %v681
      %v683 = vrot.slane %v682, 1
      %v684 = vadd.f32 %v682, %v683
      %v685 = vsel %vm621, %v636, 0.0
      %v686 = vrot.slane %v685, 4
      %v687 = vadd.f32 %v685, %v686
      %v688 = vrot.slane %v687, 2
      %v689 = vadd.f32 %v687, %v688
      %v690 = vrot.slane %v689, 1
      %v691 = vadd.f32 %v689, %v690
      %v692 = vmul.f32 %v550, %v571
      %v693 = vmul.f32 %v551, %v578
      %v694 = vmul.f32 %v552, %v585
      %v695 = vmul.f32 %v553, %v592
      %v696 = vmul.f32 %v554, %v599
      %v697 = vmul.f32 %v555, %v606
      %v698 = vmul.f32 %v556, %v613
      %v699 = vmul.f32 %v557, %v620
      %v700 = vsel %vm621, %v692, 0.0
      %v701 = vrot.slane %v700, 4
      %v702 = vadd.f32 %v700, %v701
      %v703 = vrot.slane %v702, 2
      %v704 = vadd.f32 %v702, %v703
      %v705 = vrot.slane %v704, 1
      %v706 = vadd.f32 %v704, %v705
      %v707 = vsel %vm621, %v693, 0.0
      %v708 = vrot.slane %v707, 4
      %v709 = vadd.f32 %v707, %v708
      %v710 = vrot.slane %v709, 2
      %v711 = vadd.f32 %v709, %v710
      %v712 = vrot.slane %v711, 1
      %v713 = vadd.f32 %v711, %v712
      %v714 = vsel %vm621, %v694, 0.0
      %v715 = vrot.slane %v714, 4
      %v716 = vadd.f32 %v714, %v715
      %v717 = vrot.slane %v716, 2
      %v718 = vadd.f32 %v716, %v717
      %v719 = vrot.slane %v718, 1
      %v720 = vadd.f32 %v718, %v719
      %v721 = vsel %vm621, %v695, 0.0
      %v722 = vrot.slane %v721, 4
      %v723 = vadd.f32 %v721, %v722
      %v724 = vrot.slane %v723, 2
      %v725 = vadd.f32 %v723, %v724
      %v726 = vrot.slane %v725, 1
      %v727 = vadd.f32 %v725, %v726
      %v728 = vsel %vm621, %v696, 0.0
      %v729 = vrot.slane %v728, 4
      %v730 = vadd.f32 %v728, %v729
      %v731 = vrot.slane %v730, 2
      %v732 = vadd.f32 %v730, %v731
      %v733 = vrot.slane %v732, 1
      %v734 = vadd.f32 %v732, %v733
      %v735 = vsel %vm621, %v697, 0.0
      %v736 = vrot.slane %v735, 4
      %v737 = vadd.f32 %v735, %v736
      %v738 = vrot.slane %v737, 2
      %v739 = vadd.f32 %v737, %v738
      %v740 = vrot.slane %v739, 1
      %v741 = vadd.f32 %v739, %v740
      %v742 = vsel %vm621, %v698, 0.0
      %v743 = vrot.slane %v742, 4
      %v744 = vadd.f32 %v742, %v743
      %v745 = vrot.slane %v744, 2
      %v746 = vadd.f32 %v744, %v745
      %v747 = vrot.slane %v746, 1
      %v748 = vadd.f32 %v746, %v747
      %v749 = vsel %vm621, %v699, 0.0
      %v750 = vrot.slane %v749, 4
      %v751 = vadd.f32 %v749, %v750
      %v752 = vrot.slane %v751, 2
      %v753 = vadd.f32 %v751, %v752
      %v754 = vrot.slane %v753, 1
      %v755 = vadd.f32 %v753, %v754
      %v756 = vld [vmem:[%s540] sm:$0xff]
      %vm765 = vcmask 1041409
      %v766 = vsel %vm765, %v648, %v642
      %vm767 = vcmask 1042434
      %v768 = vsel %vm767, %v654, %v766
      %vm769 = vcmask 1043459
      %v770 = vsel %vm769, %v660, %v768
      %vm771 = vcmask 1044484
      %v772 = vsel %vm771, %v666, %v770
      %vm773 = vcmask 1045509
      %v774 = vsel %vm773, %v672, %v772
      %vm775 = vcmask 1046534
      %v776 = vsel %vm775, %v678, %v774
      %vm777 = vcmask 1047559
      %v778 = vsel %vm777, %v684, %v776
      %v788 = vsel %vm765, %v713, %v706
      %v789 = vsel %vm767, %v720, %v788
      %v790 = vsel %vm769, %v727, %v789
      %v791 = vsel %vm771, %v734, %v790
      %v792 = vsel %vm773, %v741, %v791
      %v793 = vsel %vm775, %v748, %v792
      %v794 = vsel %vm777, %v755, %v793
      %795 = vrot.lane.b32.xlu0 %v794, 4
      %v796 = vpop.permute.xlu0 %795
      %799 = vrot.lane.b32.xlu0 %v636, 8
      %v800 = vpop.permute.xlu0 %799
      %803 = vrot.lane.b32.xlu0 %v756, 12
      %v804 = vpop.permute.xlu0 %803
      %v806 = vsel %vm621, %v778, %v796
      %vm807 = vcmask 64512
      %v808 = vsel %vm807, %v806, %v800
      %vm809 = vcmask 97280
      %v810 = vsel %vm809, %v808, %v804
      %v811 = vld [vmem:[%s2] sm:$0xf]
      %v813 = vsel %vm621, %v550, 0
      %v816 = vsel %vm621, %v551, 0
      %v819 = vsel %vm621, %v552, 0
      %v822 = vsel %vm621, %v553, 0
      %v825 = vsel %vm621, %v554, 0
      %v828 = vsel %vm621, %v555, 0
      %v831 = vsel %vm621, %v556, 0
      %v834 = vsel %vm621, %v557, 0
      %vm836 = vcmask 1043456
      %v838 = vsel %vm836, %v811, 0
      %840 = vmatpush.msra.mxu0 0.0
      %841 = vmatpush.msra.mxu0 0.0
      %842 = vmatpush.msra.mxu0 0.0
      %843 = vmatpush.msra.mxu0 0.0
      %844 = vmatpush.msra.mxu0 0.0
      %845 = vmatpush.msra.mxu0 0.0
      %846 = vmatpush.msra.mxu0 0.0
      %847 = vmatpush.msra.mxu0 0.0
      %848 = vmatpush.msra.mxu0 0.0
      %849 = vmatpush.msra.mxu0 0.0
      %850 = vmatpush.msra.mxu0 0.0
      %851 = vmatpush.msra.mxu0 0.0
      %852 = vmatpush.msra.mxu0 0.0
      %853 = vmatpush.msra.mxu0 0.0
      %854 = vmatpush.msra.mxu0 0.0
      %855 = vmatpush.msra.mxu0 %v838
      %856 = vmatmul.f32.gmra.mxu0 %v813
      %v857 = vpop.f32.mrf.mxu0
      %v858 = vadd.f32 0.0, %v857
      %859 = vmatmul.f32.gmra.mxu0 %v816
      %v860 = vpop.f32.mrf.mxu0
      %v861 = vadd.f32 0.0, %v860
      %862 = vmatmul.f32.gmra.mxu0 %v819
      %v863 = vpop.f32.mrf.mxu0
      %v864 = vadd.f32 0.0, %v863
      %865 = vmatmul.f32.gmra.mxu0 %v822
      %v866 = vpop.f32.mrf.mxu0
      %v867 = vadd.f32 0.0, %v866
      %868 = vmatmul.f32.gmra.mxu0 %v825
      %v869 = vpop.f32.mrf.mxu0
      %v870 = vadd.f32 0.0, %v869
      %871 = vmatmul.f32.gmra.mxu0 %v828
      %v872 = vpop.f32.mrf.mxu0
      %v873 = vadd.f32 0.0, %v872
      %874 = vmatmul.f32.gmra.mxu0 %v831
      %v875 = vpop.f32.mrf.mxu0
      %v876 = vadd.f32 0.0, %v875
      %877 = vmatmul.f32.gmra.mxu0 %v834
      %v878 = vpop.f32.mrf.mxu0
      %v879 = vadd.f32 0.0, %v878
      %880 = vdwg.mxu0
      %v881 = vld [vmem:[%s3] sm:$0xff]
      %v882 = vld [vmem:[%s3 + $0x8] sm:$0x7f]
      %vm883 = vcmask 121856
      %v885 = vsel %vm883, %v810, 0
      %vm887 = vcmask 1046528
      %v889 = vsel %vm887, %v882, 0
      %891 = vmatpush.msra.mxu0 0.0
      %892 = vmatpush.msra.mxu0 0.0
      %893 = vmatpush.msra.mxu0 0.0
      %894 = vmatpush.msra.mxu0 0.0
      %895 = vmatpush.msra.mxu0 0.0
      %896 = vmatpush.msra.mxu0 0.0
      %897 = vmatpush.msra.mxu0 0.0
      %898 = vmatpush.msra.mxu0 0.0
      %899 = vmatpush.msra.mxu0 0.0
      %900 = vmatpush.msra.mxu0 0.0
      %901 = vmatpush.msra.mxu0 0.0
      %902 = vmatpush.msra.mxu0 0.0
      %903 = vmatpush.msra.mxu0 0.0
      %904 = vmatpush.msra.mxu0 0.0
      %905 = vmatpush.msra.mxu0 %v889
      %906 = vmatpush.msra.mxu0 %v881
      %907 = vmatmul.f32.gmra.mxu0 %v885
      %v908 = vpop.f32.mrf.mxu0
      %v909 = vadd.f32 0.0, %v908
      %910 = vdwg.mxu0
      %v911 = vld [vmem:[%s4] sm:$0xf]
      %v912 = vld [vmem:[%s5] sm:$0x1]
      %v914 = vsel %vm621, %v691, 0
      %v917 = vsel %vm836, %v911, 0
      %919 = vmatpush.msra.mxu0 0.0
      %920 = vmatpush.msra.mxu0 0.0
      %921 = vmatpush.msra.mxu0 0.0
      %922 = vmatpush.msra.mxu0 0.0
      %923 = vmatpush.msra.mxu0 0.0
      %924 = vmatpush.msra.mxu0 0.0
      %925 = vmatpush.msra.mxu0 0.0
      %926 = vmatpush.msra.mxu0 0.0
      %927 = vmatpush.msra.mxu0 0.0
      %928 = vmatpush.msra.mxu0 0.0
      %929 = vmatpush.msra.mxu0 0.0
      %930 = vmatpush.msra.mxu0 0.0
      %931 = vmatpush.msra.mxu0 0.0
      %932 = vmatpush.msra.mxu0 0.0
      %933 = vmatpush.msra.mxu0 0.0
      %934 = vmatpush.msra.mxu0 %v917
      %935 = vmatmul.f32.gmra.mxu0 %v914
      %v936 = vpop.f32.mrf.mxu0
      %v937 = vadd.f32 %v912, %v936
      %938 = vdwg.mxu0
      %v940 = vrot.slane %v909, 1
      %v941 = vrot.slane %v909, 2
      %v942 = vrot.slane %v909, 3
      %v943 = vrot.slane %v909, 4
      %v944 = vrot.slane %v909, 5
      %v945 = vrot.slane %v909, 6
      %v946 = vrot.slane %v909, 7
      %v947 = vperm.slane %v909, 0
      %v948 = vperm.slane %v940, 0
      %v949 = vperm.slane %v941, 0
      %v950 = vperm.slane %v942, 0
      %v951 = vperm.slane %v943, 0
      %v952 = vperm.slane %v944, 0
      %v953 = vperm.slane %v945, 0
      %v954 = vperm.slane %v946, 0
      %v963 = vadd.f32 %v858, %v947
      %v964 = vadd.f32 %v861, %v948
      %v965 = vadd.f32 %v864, %v949
      %v966 = vadd.f32 %v867, %v950
      %v967 = vadd.f32 %v870, %v951
      %v968 = vadd.f32 %v873, %v952
      %v969 = vadd.f32 %v876, %v953
      %v970 = vadd.f32 %v879, %v954
      %971 = vrot.lane.b32.xlu0 %v909, 120
      %v972 = vpop.permute.xlu0 %971
      %v974 = vadd.f32 %v963, %v972
      %v975 = vadd.f32 %v964, %v972
      %v976 = vadd.f32 %v965, %v972
      %v977 = vadd.f32 %v966, %v972
      %v978 = vadd.f32 %v967, %v972
      %v979 = vadd.f32 %v968, %v972
      %v980 = vadd.f32 %v969, %v972
      %v981 = vadd.f32 %v970, %v972
      %v982 = vperm.slane %v937, 0
      %v983 = vadd.f32 %v974, %v982
      %v984 = vadd.f32 %v975, %v982
      %v985 = vadd.f32 %v976, %v982
      %v986 = vadd.f32 %v977, %v982
      %v987 = vadd.f32 %v978, %v982
      %v988 = vadd.f32 %v979, %v982
      %v989 = vadd.f32 %v980, %v982
      %v990 = vadd.f32 %v981, %v982
      %v991 = vtanh.pop %v983
      %v992 = vtanh.pop %v984
      %v993 = vtanh.pop %v985
      %v994 = vtanh.pop %v986
      %v995 = vtanh.pop %v987
      %v996 = vtanh.pop %v988
      %v997 = vtanh.pop %v989
      %v998 = vtanh.pop %v990
      %v999 = vsel %vm807, %v991, 0.0
      %v1000 = vsel %vm807, %v992, 0.0
      %v1001 = vadd.f32 %v999, %v1000
      %v1002 = vsel %vm807, %v993, 0.0
      %v1003 = vadd.f32 %v1001, %v1002
      %v1004 = vsel %vm807, %v994, 0.0
      %v1005 = vadd.f32 %v1003, %v1004
      %v1006 = vsel %vm807, %v995, 0.0
      %v1007 = vadd.f32 %v1005, %v1006
      %v1008 = vsel %vm807, %v996, 0.0
      %v1009 = vadd.f32 %v1007, %v1008
      %v1010 = vsel %vm807, %v997, 0.0
      %v1011 = vadd.f32 %v1009, %v1010
      %v1012 = vsel %vm807, %v998, 0.0
      %v1013 = vadd.f32 %v1011, %v1012
      %v1014 = vrot.slane %v999, 4
      %v1015 = vadd.f32 %v999, %v1014
      %v1016 = vrot.slane %v1015, 2
      %v1017 = vadd.f32 %v1015, %v1016
      %v1018 = vrot.slane %v1017, 1
      %v1019 = vadd.f32 %v1017, %v1018
      %v1020 = vrot.slane %v1000, 4
      %v1021 = vadd.f32 %v1000, %v1020
      %v1022 = vrot.slane %v1021, 2
      %v1023 = vadd.f32 %v1021, %v1022
      %v1024 = vrot.slane %v1023, 1
      %v1025 = vadd.f32 %v1023, %v1024
      %v1026 = vrot.slane %v1002, 4
      %v1027 = vadd.f32 %v1002, %v1026
      %v1028 = vrot.slane %v1027, 2
      %v1029 = vadd.f32 %v1027, %v1028
      %v1030 = vrot.slane %v1029, 1
      %v1031 = vadd.f32 %v1029, %v1030
      %v1032 = vrot.slane %v1004, 4
      %v1033 = vadd.f32 %v1004, %v1032
      %v1034 = vrot.slane %v1033, 2
      %v1035 = vadd.f32 %v1033, %v1034
      %v1036 = vrot.slane %v1035, 1
      %v1037 = vadd.f32 %v1035, %v1036
      %v1038 = vrot.slane %v1006, 4
      %v1039 = vadd.f32 %v1006, %v1038
      %v1040 = vrot.slane %v1039, 2
      %v1041 = vadd.f32 %v1039, %v1040
      %v1042 = vrot.slane %v1041, 1
      %v1043 = vadd.f32 %v1041, %v1042
      %v1044 = vrot.slane %v1008, 4
      %v1045 = vadd.f32 %v1008, %v1044
      %v1046 = vrot.slane %v1045, 2
      %v1047 = vadd.f32 %v1045, %v1046
      %v1048 = vrot.slane %v1047, 1
      %v1049 = vadd.f32 %v1047, %v1048
      %v1050 = vrot.slane %v1010, 4
      %v1051 = vadd.f32 %v1010, %v1050
      %v1052 = vrot.slane %v1051, 2
      %v1053 = vadd.f32 %v1051, %v1052
      %v1054 = vrot.slane %v1053, 1
      %v1055 = vadd.f32 %v1053, %v1054
      %v1056 = vrot.slane %v1012, 4
      %v1057 = vadd.f32 %v1012, %v1056
      %v1058 = vrot.slane %v1057, 2
      %v1059 = vadd.f32 %v1057, %v1058
      %v1060 = vrot.slane %v1059, 1
      %v1061 = vadd.f32 %v1059, %v1060
      %v1062 = vsel %vm807, %v1013, 0.0
      %v1063 = vrot.slane %v1062, 4
      %v1064 = vadd.f32 %v1062, %v1063
      %v1065 = vrot.slane %v1064, 2
      %v1066 = vadd.f32 %v1064, %v1065
      %v1067 = vrot.slane %v1066, 1
      %v1068 = vadd.f32 %v1066, %v1067
      %v1069 = vmul.f32 %v991, %v571
      %v1070 = vmul.f32 %v992, %v578
      %v1071 = vmul.f32 %v993, %v585
      %v1072 = vmul.f32 %v994, %v592
      %v1073 = vmul.f32 %v995, %v599
      %v1074 = vmul.f32 %v996, %v606
      %v1075 = vmul.f32 %v997, %v613
      %v1076 = vmul.f32 %v998, %v620
      %v1077 = vsel %vm807, %v1069, 0.0
      %v1078 = vrot.slane %v1077, 4
      %v1079 = vadd.f32 %v1077, %v1078
      %v1080 = vrot.slane %v1079, 2
      %v1081 = vadd.f32 %v1079, %v1080
      %v1082 = vrot.slane %v1081, 1
      %v1083 = vadd.f32 %v1081, %v1082
      %v1084 = vsel %vm807, %v1070, 0.0
      %v1085 = vrot.slane %v1084, 4
      %v1086 = vadd.f32 %v1084, %v1085
      %v1087 = vrot.slane %v1086, 2
      %v1088 = vadd.f32 %v1086, %v1087
      %v1089 = vrot.slane %v1088, 1
      %v1090 = vadd.f32 %v1088, %v1089
      %v1091 = vsel %vm807, %v1071, 0.0
      %v1092 = vrot.slane %v1091, 4
      %v1093 = vadd.f32 %v1091, %v1092
      %v1094 = vrot.slane %v1093, 2
      %v1095 = vadd.f32 %v1093, %v1094
      %v1096 = vrot.slane %v1095, 1
      %v1097 = vadd.f32 %v1095, %v1096
      %v1098 = vsel %vm807, %v1072, 0.0
      %v1099 = vrot.slane %v1098, 4
      %v1100 = vadd.f32 %v1098, %v1099
      %v1101 = vrot.slane %v1100, 2
      %v1102 = vadd.f32 %v1100, %v1101
      %v1103 = vrot.slane %v1102, 1
      %v1104 = vadd.f32 %v1102, %v1103
      %v1105 = vsel %vm807, %v1073, 0.0
      %v1106 = vrot.slane %v1105, 4
      %v1107 = vadd.f32 %v1105, %v1106
      %v1108 = vrot.slane %v1107, 2
      %v1109 = vadd.f32 %v1107, %v1108
      %v1110 = vrot.slane %v1109, 1
      %v1111 = vadd.f32 %v1109, %v1110
      %v1112 = vsel %vm807, %v1074, 0.0
      %v1113 = vrot.slane %v1112, 4
      %v1114 = vadd.f32 %v1112, %v1113
      %v1115 = vrot.slane %v1114, 2
      %v1116 = vadd.f32 %v1114, %v1115
      %v1117 = vrot.slane %v1116, 1
      %v1118 = vadd.f32 %v1116, %v1117
      %v1119 = vsel %vm807, %v1075, 0.0
      %v1120 = vrot.slane %v1119, 4
      %v1121 = vadd.f32 %v1119, %v1120
      %v1122 = vrot.slane %v1121, 2
      %v1123 = vadd.f32 %v1121, %v1122
      %v1124 = vrot.slane %v1123, 1
      %v1125 = vadd.f32 %v1123, %v1124
      %v1126 = vsel %vm807, %v1076, 0.0
      %v1127 = vrot.slane %v1126, 4
      %v1128 = vadd.f32 %v1126, %v1127
      %v1129 = vrot.slane %v1128, 2
      %v1130 = vadd.f32 %v1128, %v1129
      %v1131 = vrot.slane %v1130, 1
      %v1132 = vadd.f32 %v1130, %v1131
      %v1141 = vsel %vm765, %v1025, %v1019
      %v1142 = vsel %vm767, %v1031, %v1141
      %v1143 = vsel %vm769, %v1037, %v1142
      %v1144 = vsel %vm771, %v1043, %v1143
      %v1145 = vsel %vm773, %v1049, %v1144
      %v1146 = vsel %vm775, %v1055, %v1145
      %v1147 = vsel %vm777, %v1061, %v1146
      %v1157 = vsel %vm765, %v1090, %v1083
      %v1158 = vsel %vm767, %v1097, %v1157
      %v1159 = vsel %vm769, %v1104, %v1158
      %v1160 = vsel %vm771, %v1111, %v1159
      %v1161 = vsel %vm773, %v1118, %v1160
      %v1162 = vsel %vm775, %v1125, %v1161
      %v1163 = vsel %vm777, %v1132, %v1162
      %1164 = vrot.lane.b32.xlu0 %v1163, 8
      %v1165 = vpop.permute.xlu0 %1164
      %1168 = vrot.lane.b32.xlu0 %v1013, 16
      %v1169 = vpop.permute.xlu0 %1168
      %v1171 = vsel %vm807, %v1147, %v1165
      %vm1172 = vcmask 130048
      %v1173 = vsel %vm1172, %v1171, %v1169
      %v1174 = vld [vmem:[%s6] sm:$0xff]
      %v1176 = vsel %vm807, %v991, 0
      %v1179 = vsel %vm807, %v992, 0
      %v1182 = vsel %vm807, %v993, 0
      %v1185 = vsel %vm807, %v994, 0
      %v1188 = vsel %vm807, %v995, 0
      %v1191 = vsel %vm807, %v996, 0
      %v1194 = vsel %vm807, %v997, 0
      %v1197 = vsel %vm807, %v998, 0
      %1199 = vmatpush.msra.mxu0 0.0
      %1200 = vmatpush.msra.mxu0 0.0
      %1201 = vmatpush.msra.mxu0 0.0
      %1202 = vmatpush.msra.mxu0 0.0
      %1203 = vmatpush.msra.mxu0 0.0
      %1204 = vmatpush.msra.mxu0 0.0
      %1205 = vmatpush.msra.mxu0 0.0
      %1206 = vmatpush.msra.mxu0 0.0
      %1207 = vmatpush.msra.mxu0 0.0
      %1208 = vmatpush.msra.mxu0 0.0
      %1209 = vmatpush.msra.mxu0 0.0
      %1210 = vmatpush.msra.mxu0 0.0
      %1211 = vmatpush.msra.mxu0 0.0
      %1212 = vmatpush.msra.mxu0 0.0
      %1213 = vmatpush.msra.mxu0 0.0
      %1214 = vmatpush.msra.mxu0 %v1174
      %1215 = vmatmul.f32.gmra.mxu0 %v1176
      %v1216 = vpop.f32.mrf.mxu0
      %v1217 = vadd.f32 0.0, %v1216
      %1218 = vmatmul.f32.gmra.mxu0 %v1179
      %v1219 = vpop.f32.mrf.mxu0
      %v1220 = vadd.f32 0.0, %v1219
      %1221 = vmatmul.f32.gmra.mxu0 %v1182
      %v1222 = vpop.f32.mrf.mxu0
      %v1223 = vadd.f32 0.0, %v1222
      %1224 = vmatmul.f32.gmra.mxu0 %v1185
      %v1225 = vpop.f32.mrf.mxu0
      %v1226 = vadd.f32 0.0, %v1225
      %1227 = vmatmul.f32.gmra.mxu0 %v1188
      %v1228 = vpop.f32.mrf.mxu0
      %v1229 = vadd.f32 0.0, %v1228
      %1230 = vmatmul.f32.gmra.mxu0 %v1191
      %v1231 = vpop.f32.mrf.mxu0
      %v1232 = vadd.f32 0.0, %v1231
      %1233 = vmatmul.f32.gmra.mxu0 %v1194
      %v1234 = vpop.f32.mrf.mxu0
      %v1235 = vadd.f32 0.0, %v1234
      %1236 = vmatmul.f32.gmra.mxu0 %v1197
      %v1237 = vpop.f32.mrf.mxu0
      %v1238 = vadd.f32 0.0, %v1237
      %1239 = vdwg.mxu0
      %v1240 = vld [vmem:[%s7] sm:$0xff]
      %v1241 = vld [vmem:[%s7 + $0x8] sm:$0xff]
      %v1242 = vld [vmem:[%s7 + $0x10] sm:$0xff]
      %vm1243 = vcmask 195584
      %v1245 = vsel %vm1243, %v1173, 0
      %1247 = vmatpush.msra.mxu0 0.0
      %1248 = vmatpush.msra.mxu0 0.0
      %1249 = vmatpush.msra.mxu0 0.0
      %1250 = vmatpush.msra.mxu0 0.0
      %1251 = vmatpush.msra.mxu0 0.0
      %1252 = vmatpush.msra.mxu0 0.0
      %1253 = vmatpush.msra.mxu0 0.0
      %1254 = vmatpush.msra.mxu0 0.0
      %1255 = vmatpush.msra.mxu0 0.0
      %1256 = vmatpush.msra.mxu0 0.0
      %1257 = vmatpush.msra.mxu0 0.0
      %1258 = vmatpush.msra.mxu0 0.0
      %1259 = vmatpush.msra.mxu0 0.0
      %1260 = vmatpush.msra.mxu0 %v1242
      %1261 = vmatpush.msra.mxu0 %v1241
      %1262 = vmatpush.msra.mxu0 %v1240
      %1263 = vmatmul.f32.gmra.mxu0 %v1245
      %v1264 = vpop.f32.mrf.mxu0
      %v1265 = vadd.f32 0.0, %v1264
      %1266 = vdwg.mxu0
      %v1267 = vld [vmem:[%s8] sm:$0xff]
      %v1269 = vsel %vm807, %v1068, 0
      %1271 = vmatpush.msra.mxu0 0.0
      %1272 = vmatpush.msra.mxu0 0.0
      %1273 = vmatpush.msra.mxu0 0.0
      %1274 = vmatpush.msra.mxu0 0.0
      %1275 = vmatpush.msra.mxu0 0.0
      %1276 = vmatpush.msra.mxu0 0.0
      %1277 = vmatpush.msra.mxu0 0.0
      %1278 = vmatpush.msra.mxu0 0.0
      %1279 = vmatpush.msra.mxu0 0.0
      %1280 = vmatpush.msra.mxu0 0.0
      %1281 = vmatpush.msra.mxu0 0.0
      %1282 = vmatpush.msra.mxu0 0.0
      %1283 = vmatpush.msra.mxu0 0.0
      %1284 = vmatpush.msra.mxu0 0.0
      %1285 = vmatpush.msra.mxu0 0.0
      %1286 = vmatpush.msra.mxu0 %v1267
      %1287 = vmatmul.f32.gmra.mxu0 %v1269
      %v1288 = vpop.f32.mrf.mxu0
      %v1289 = vadd.f32 0.0, %v1288
      %1290 = vdwg.mxu0
      %v1291 = vld [vmem:[%s9] sm:$0x1]
      %v1292 = vadd.f32 %v1289, %v1291
      %v1294 = vrot.slane %v1265, 1
      %v1295 = vrot.slane %v1265, 2
      %v1296 = vrot.slane %v1265, 3
      %v1297 = vrot.slane %v1265, 4
      %v1298 = vrot.slane %v1265, 5
      %v1299 = vrot.slane %v1265, 6
      %v1300 = vrot.slane %v1265, 7
      %v1301 = vperm.slane %v1265, 0
      %v1302 = vperm.slane %v1294, 0
      %v1303 = vperm.slane %v1295, 0
      %v1304 = vperm.slane %v1296, 0
      %v1305 = vperm.slane %v1297, 0
      %v1306 = vperm.slane %v1298, 0
      %v1307 = vperm.slane %v1299, 0
      %v1308 = vperm.slane %v1300, 0
      %v1317 = vadd.f32 %v1217, %v1301
      %v1318 = vadd.f32 %v1220, %v1302
      %v1319 = vadd.f32 %v1223, %v1303
      %v1320 = vadd.f32 %v1226, %v1304
      %v1321 = vadd.f32 %v1229, %v1305
      %v1322 = vadd.f32 %v1232, %v1306
      %v1323 = vadd.f32 %v1235, %v1307
      %v1324 = vadd.f32 %v1238, %v1308
      %1325 = vrot.lane.b32.xlu0 %v1265, 120
      %v1326 = vpop.permute.xlu0 %1325
      %v1328 = vadd.f32 %v1317, %v1326
      %v1329 = vadd.f32 %v1318, %v1326
      %v1330 = vadd.f32 %v1319, %v1326
      %v1331 = vadd.f32 %v1320, %v1326
      %v1332 = vadd.f32 %v1321, %v1326
      %v1333 = vadd.f32 %v1322, %v1326
      %v1334 = vadd.f32 %v1323, %v1326
      %v1335 = vadd.f32 %v1324, %v1326
      %v1336 = vperm.slane %v1292, 0
      %v1337 = vadd.f32 %v1328, %v1336
      %v1338 = vadd.f32 %v1329, %v1336
      %v1339 = vadd.f32 %v1330, %v1336
      %v1340 = vadd.f32 %v1331, %v1336
      %v1341 = vadd.f32 %v1332, %v1336
      %v1342 = vadd.f32 %v1333, %v1336
      %v1343 = vadd.f32 %v1334, %v1336
      %v1344 = vadd.f32 %v1335, %v1336
      %v1345 = vtanh.pop %v1337
      %v1346 = vtanh.pop %v1338
      %v1347 = vtanh.pop %v1339
      %v1348 = vtanh.pop %v1340
      %v1349 = vtanh.pop %v1341
      %v1350 = vtanh.pop %v1342
      %v1351 = vtanh.pop %v1343
      %v1352 = vtanh.pop %v1344
      %v1353 = vsel %vm807, %v1345, 0.0
      %v1354 = vsel %vm807, %v1346, 0.0
      %v1355 = vadd.f32 %v1353, %v1354
      %v1356 = vsel %vm807, %v1347, 0.0
      %v1357 = vadd.f32 %v1355, %v1356
      %v1358 = vsel %vm807, %v1348, 0.0
      %v1359 = vadd.f32 %v1357, %v1358
      %v1360 = vsel %vm807, %v1349, 0.0
      %v1361 = vadd.f32 %v1359, %v1360
      %v1362 = vsel %vm807, %v1350, 0.0
      %v1363 = vadd.f32 %v1361, %v1362
      %v1364 = vsel %vm807, %v1351, 0.0
      %v1365 = vadd.f32 %v1363, %v1364
      %v1366 = vsel %vm807, %v1352, 0.0
      %v1367 = vadd.f32 %v1365, %v1366
      %v1368 = vrot.slane %v1353, 4
      %v1369 = vadd.f32 %v1353, %v1368
      %v1370 = vrot.slane %v1369, 2
      %v1371 = vadd.f32 %v1369, %v1370
      %v1372 = vrot.slane %v1371, 1
      %v1373 = vadd.f32 %v1371, %v1372
      %v1374 = vrot.slane %v1354, 4
      %v1375 = vadd.f32 %v1354, %v1374
      %v1376 = vrot.slane %v1375, 2
      %v1377 = vadd.f32 %v1375, %v1376
      %v1378 = vrot.slane %v1377, 1
      %v1379 = vadd.f32 %v1377, %v1378
      %v1380 = vrot.slane %v1356, 4
      %v1381 = vadd.f32 %v1356, %v1380
      %v1382 = vrot.slane %v1381, 2
      %v1383 = vadd.f32 %v1381, %v1382
      %v1384 = vrot.slane %v1383, 1
      %v1385 = vadd.f32 %v1383, %v1384
      %v1386 = vrot.slane %v1358, 4
      %v1387 = vadd.f32 %v1358, %v1386
      %v1388 = vrot.slane %v1387, 2
      %v1389 = vadd.f32 %v1387, %v1388
      %v1390 = vrot.slane %v1389, 1
      %v1391 = vadd.f32 %v1389, %v1390
      %v1392 = vrot.slane %v1360, 4
      %v1393 = vadd.f32 %v1360, %v1392
      %v1394 = vrot.slane %v1393, 2
      %v1395 = vadd.f32 %v1393, %v1394
      %v1396 = vrot.slane %v1395, 1
      %v1397 = vadd.f32 %v1395, %v1396
      %v1398 = vrot.slane %v1362, 4
      %v1399 = vadd.f32 %v1362, %v1398
      %v1400 = vrot.slane %v1399, 2
      %v1401 = vadd.f32 %v1399, %v1400
      %v1402 = vrot.slane %v1401, 1
      %v1403 = vadd.f32 %v1401, %v1402
      %v1404 = vrot.slane %v1364, 4
      %v1405 = vadd.f32 %v1364, %v1404
      %v1406 = vrot.slane %v1405, 2
      %v1407 = vadd.f32 %v1405, %v1406
      %v1408 = vrot.slane %v1407, 1
      %v1409 = vadd.f32 %v1407, %v1408
      %v1410 = vrot.slane %v1366, 4
      %v1411 = vadd.f32 %v1366, %v1410
      %v1412 = vrot.slane %v1411, 2
      %v1413 = vadd.f32 %v1411, %v1412
      %v1414 = vrot.slane %v1413, 1
      %v1415 = vadd.f32 %v1413, %v1414
      %v1416 = vsel %vm807, %v1367, 0.0
      %v1417 = vrot.slane %v1416, 4
      %v1418 = vadd.f32 %v1416, %v1417
      %v1419 = vrot.slane %v1418, 2
      %v1420 = vadd.f32 %v1418, %v1419
      %v1421 = vrot.slane %v1420, 1
      %v1422 = vadd.f32 %v1420, %v1421
      %v1423 = vmul.f32 %v1345, %v571
      %v1424 = vmul.f32 %v1346, %v578
      %v1425 = vmul.f32 %v1347, %v585
      %v1426 = vmul.f32 %v1348, %v592
      %v1427 = vmul.f32 %v1349, %v599
      %v1428 = vmul.f32 %v1350, %v606
      %v1429 = vmul.f32 %v1351, %v613
      %v1430 = vmul.f32 %v1352, %v620
      %v1431 = vsel %vm807, %v1423, 0.0
      %v1432 = vrot.slane %v1431, 4
      %v1433 = vadd.f32 %v1431, %v1432
      %v1434 = vrot.slane %v1433, 2
      %v1435 = vadd.f32 %v1433, %v1434
      %v1436 = vrot.slane %v1435, 1
      %v1437 = vadd.f32 %v1435, %v1436
      %v1438 = vsel %vm807, %v1424, 0.0
      %v1439 = vrot.slane %v1438, 4
      %v1440 = vadd.f32 %v1438, %v1439
      %v1441 = vrot.slane %v1440, 2
      %v1442 = vadd.f32 %v1440, %v1441
      %v1443 = vrot.slane %v1442, 1
      %v1444 = vadd.f32 %v1442, %v1443
      %v1445 = vsel %vm807, %v1425, 0.0
      %v1446 = vrot.slane %v1445, 4
      %v1447 = vadd.f32 %v1445, %v1446
      %v1448 = vrot.slane %v1447, 2
      %v1449 = vadd.f32 %v1447, %v1448
      %v1450 = vrot.slane %v1449, 1
      %v1451 = vadd.f32 %v1449, %v1450
      %v1452 = vsel %vm807, %v1426, 0.0
      %v1453 = vrot.slane %v1452, 4
      %v1454 = vadd.f32 %v1452, %v1453
      %v1455 = vrot.slane %v1454, 2
      %v1456 = vadd.f32 %v1454, %v1455
      %v1457 = vrot.slane %v1456, 1
      %v1458 = vadd.f32 %v1456, %v1457
      %v1459 = vsel %vm807, %v1427, 0.0
      %v1460 = vrot.slane %v1459, 4
      %v1461 = vadd.f32 %v1459, %v1460
      %v1462 = vrot.slane %v1461, 2
      %v1463 = vadd.f32 %v1461, %v1462
      %v1464 = vrot.slane %v1463, 1
      %v1465 = vadd.f32 %v1463, %v1464
      %v1466 = vsel %vm807, %v1428, 0.0
      %v1467 = vrot.slane %v1466, 4
      %v1468 = vadd.f32 %v1466, %v1467
      %v1469 = vrot.slane %v1468, 2
      %v1470 = vadd.f32 %v1468, %v1469
      %v1471 = vrot.slane %v1470, 1
      %v1472 = vadd.f32 %v1470, %v1471
      %v1473 = vsel %vm807, %v1429, 0.0
      %v1474 = vrot.slane %v1473, 4
      %v1475 = vadd.f32 %v1473, %v1474
      %v1476 = vrot.slane %v1475, 2
      %v1477 = vadd.f32 %v1475, %v1476
      %v1478 = vrot.slane %v1477, 1
      %v1479 = vadd.f32 %v1477, %v1478
      %v1480 = vsel %vm807, %v1430, 0.0
      %v1481 = vrot.slane %v1480, 4
      %v1482 = vadd.f32 %v1480, %v1481
      %v1483 = vrot.slane %v1482, 2
      %v1484 = vadd.f32 %v1482, %v1483
      %v1485 = vrot.slane %v1484, 1
      %v1486 = vadd.f32 %v1484, %v1485
      %v1495 = vsel %vm765, %v1379, %v1373
      %v1496 = vsel %vm767, %v1385, %v1495
      %v1497 = vsel %vm769, %v1391, %v1496
      %v1498 = vsel %vm771, %v1397, %v1497
      %v1499 = vsel %vm773, %v1403, %v1498
      %v1500 = vsel %vm775, %v1409, %v1499
      %v1501 = vsel %vm777, %v1415, %v1500
      %v1511 = vsel %vm765, %v1444, %v1437
      %v1512 = vsel %vm767, %v1451, %v1511
      %v1513 = vsel %vm769, %v1458, %v1512
      %v1514 = vsel %vm771, %v1465, %v1513
      %v1515 = vsel %vm773, %v1472, %v1514
      %v1516 = vsel %vm775, %v1479, %v1515
      %v1517 = vsel %vm777, %v1486, %v1516
      %1518 = vrot.lane.b32.xlu0 %v1517, 8
      %v1519 = vpop.permute.xlu0 %1518
      %1522 = vrot.lane.b32.xlu0 %v1367, 16
      %v1523 = vpop.permute.xlu0 %1522
      %v1525 = vsel %vm807, %v1501, %v1519
      %v1526 = vsel %vm1172, %v1525, %v1523
      %v1527 = vld [vmem:[%s10] sm:$0xff]
      %v1529 = vsel %vm807, %v1345, 0
      %v1532 = vsel %vm807, %v1346, 0
      %v1535 = vsel %vm807, %v1347, 0
      %v1538 = vsel %vm807, %v1348, 0
      %v1541 = vsel %vm807, %v1349, 0
      %v1544 = vsel %vm807, %v1350, 0
      %v1547 = vsel %vm807, %v1351, 0
      %v1550 = vsel %vm807, %v1352, 0
      %1552 = vmatpush.msra.mxu0 0.0
      %1553 = vmatpush.msra.mxu0 0.0
      %1554 = vmatpush.msra.mxu0 0.0
      %1555 = vmatpush.msra.mxu0 0.0
      %1556 = vmatpush.msra.mxu0 0.0
      %1557 = vmatpush.msra.mxu0 0.0
      %1558 = vmatpush.msra.mxu0 0.0
      %1559 = vmatpush.msra.mxu0 0.0
      %1560 = vmatpush.msra.mxu0 0.0
      %1561 = vmatpush.msra.mxu0 0.0
      %1562 = vmatpush.msra.mxu0 0.0
      %1563 = vmatpush.msra.mxu0 0.0
      %1564 = vmatpush.msra.mxu0 0.0
      %1565 = vmatpush.msra.mxu0 0.0
      %1566 = vmatpush.msra.mxu0 0.0
      %1567 = vmatpush.msra.mxu0 %v1527
      %1568 = vmatmul.f32.gmra.mxu0 %v1529
      %v1569 = vpop.f32.mrf.mxu0
      %v1570 = vadd.f32 0.0, %v1569
      %1571 = vmatmul.f32.gmra.mxu0 %v1532
      %v1572 = vpop.f32.mrf.mxu0
      %v1573 = vadd.f32 0.0, %v1572
      %1574 = vmatmul.f32.gmra.mxu0 %v1535
      %v1575 = vpop.f32.mrf.mxu0
      %v1576 = vadd.f32 0.0, %v1575
      %1577 = vmatmul.f32.gmra.mxu0 %v1538
      %v1578 = vpop.f32.mrf.mxu0
      %v1579 = vadd.f32 0.0, %v1578
      %1580 = vmatmul.f32.gmra.mxu0 %v1541
      %v1581 = vpop.f32.mrf.mxu0
      %v1582 = vadd.f32 0.0, %v1581
      %1583 = vmatmul.f32.gmra.mxu0 %v1544
      %v1584 = vpop.f32.mrf.mxu0
      %v1585 = vadd.f32 0.0, %v1584
      %1586 = vmatmul.f32.gmra.mxu0 %v1547
      %v1587 = vpop.f32.mrf.mxu0
      %v1588 = vadd.f32 0.0, %v1587
      %1589 = vmatmul.f32.gmra.mxu0 %v1550
      %v1590 = vpop.f32.mrf.mxu0
      %v1591 = vadd.f32 0.0, %v1590
      %1592 = vdwg.mxu0
      %v1593 = vld [vmem:[%s11] sm:$0xff]
      %v1594 = vld [vmem:[%s11 + $0x8] sm:$0xff]
      %v1595 = vld [vmem:[%s11 + $0x10] sm:$0xff]
      %v1597 = vsel %vm1243, %v1526, 0
      %1599 = vmatpush.msra.mxu0 0.0
      %1600 = vmatpush.msra.mxu0 0.0
      %1601 = vmatpush.msra.mxu0 0.0
      %1602 = vmatpush.msra.mxu0 0.0
      %1603 = vmatpush.msra.mxu0 0.0
      %1604 = vmatpush.msra.mxu0 0.0
      %1605 = vmatpush.msra.mxu0 0.0
      %1606 = vmatpush.msra.mxu0 0.0
      %1607 = vmatpush.msra.mxu0 0.0
      %1608 = vmatpush.msra.mxu0 0.0
      %1609 = vmatpush.msra.mxu0 0.0
      %1610 = vmatpush.msra.mxu0 0.0
      %1611 = vmatpush.msra.mxu0 0.0
      %1612 = vmatpush.msra.mxu0 %v1595
      %1613 = vmatpush.msra.mxu0 %v1594
      %1614 = vmatpush.msra.mxu0 %v1593
      %1615 = vmatmul.f32.gmra.mxu0 %v1597
      %v1616 = vpop.f32.mrf.mxu0
      %v1617 = vadd.f32 0.0, %v1616
      %1618 = vdwg.mxu0
      %v1619 = vld [vmem:[%s12] sm:$0xff]
      %v1621 = vsel %vm807, %v1422, 0
      %1623 = vmatpush.msra.mxu0 0.0
      %1624 = vmatpush.msra.mxu0 0.0
      %1625 = vmatpush.msra.mxu0 0.0
      %1626 = vmatpush.msra.mxu0 0.0
      %1627 = vmatpush.msra.mxu0 0.0
      %1628 = vmatpush.msra.mxu0 0.0
      %1629 = vmatpush.msra.mxu0 0.0
      %1630 = vmatpush.msra.mxu0 0.0
      %1631 = vmatpush.msra.mxu0 0.0
      %1632 = vmatpush.msra.mxu0 0.0
      %1633 = vmatpush.msra.mxu0 0.0
      %1634 = vmatpush.msra.mxu0 0.0
      %1635 = vmatpush.msra.mxu0 0.0
      %1636 = vmatpush.msra.mxu0 0.0
      %1637 = vmatpush.msra.mxu0 0.0
      %1638 = vmatpush.msra.mxu0 %v1619
      %1639 = vmatmul.f32.gmra.mxu0 %v1621
      %v1640 = vpop.f32.mrf.mxu0
      %v1641 = vadd.f32 0.0, %v1640
      %1642 = vdwg.mxu0
      %1651 = vrot.lane.b32.xlu0 %v1570, 8
      %v1652 = vpop.permute.xlu0 %1651
      %1653 = vrot.lane.b32.xlu0 %v1573, 8
      %v1654 = vpop.permute.xlu0 %1653
      %1655 = vrot.lane.b32.xlu0 %v1576, 8
      %v1656 = vpop.permute.xlu0 %1655
      %1657 = vrot.lane.b32.xlu0 %v1579, 8
      %v1658 = vpop.permute.xlu0 %1657
      %1659 = vrot.lane.b32.xlu0 %v1582, 8
      %v1660 = vpop.permute.xlu0 %1659
      %1661 = vrot.lane.b32.xlu0 %v1585, 8
      %v1662 = vpop.permute.xlu0 %1661
      %1663 = vrot.lane.b32.xlu0 %v1588, 8
      %v1664 = vpop.permute.xlu0 %1663
      %1665 = vrot.lane.b32.xlu0 %v1591, 8
      %v1666 = vpop.permute.xlu0 %1665
      %v1675 = vadd.f32 %v1217, %v1652
      %v1676 = vadd.f32 %v1220, %v1654
      %v1677 = vadd.f32 %v1223, %v1656
      %v1678 = vadd.f32 %v1226, %v1658
      %v1679 = vadd.f32 %v1229, %v1660
      %v1680 = vadd.f32 %v1232, %v1662
      %v1681 = vadd.f32 %v1235, %v1664
      %v1682 = vadd.f32 %v1238, %v1666
      %1684 = vrot.lane.b32.xlu0 %v1617, 16
      %v1685 = vpop.permute.xlu0 %1684
      %v1687 = vadd.f32 %v1265, %v1685
      %1689 = vrot.lane.b32.xlu0 %v1641, 8
      %v1690 = vpop.permute.xlu0 %1689
      %v1692 = vadd.f32 %v1289, %v1690
      %v1693 = vld [vmem:[%s13] sm:$0x1]
      %v1694 = vld [vmem:[%s14] sm:$0x1]
      %v1696 = vrot.slane %v1687, 1
      %v1697 = vrot.slane %v1687, 2
      %v1698 = vrot.slane %v1687, 3
      %v1699 = vrot.slane %v1687, 4
      %v1700 = vrot.slane %v1687, 5
      %v1701 = vrot.slane %v1687, 6
      %v1702 = vrot.slane %v1687, 7
      %v1703 = vperm.slane %v1687, 0
      %v1704 = vperm.slane %v1696, 0
      %v1705 = vperm.slane %v1697, 0
      %v1706 = vperm.slane %v1698, 0
      %v1707 = vperm.slane %v1699, 0
      %v1708 = vperm.slane %v1700, 0
      %v1709 = vperm.slane %v1701, 0
      %v1710 = vperm.slane %v1702, 0
      %1711 = vrot.lane.b32.xlu0 %v1703, 120
      %v1712 = vpop.permute.xlu0 %1711
      %1713 = vrot.lane.b32.xlu0 %v1704, 120
      %v1714 = vpop.permute.xlu0 %1713
      %1715 = vrot.lane.b32.xlu0 %v1705, 120
      %v1716 = vpop.permute.xlu0 %1715
      %1717 = vrot.lane.b32.xlu0 %v1706, 120
      %v1718 = vpop.permute.xlu0 %1717
      %1719 = vrot.lane.b32.xlu0 %v1707, 120
      %v1720 = vpop.permute.xlu0 %1719
      %1721 = vrot.lane.b32.xlu0 %v1708, 120
      %v1722 = vpop.permute.xlu0 %1721
      %1723 = vrot.lane.b32.xlu0 %v1709, 120
      %v1724 = vpop.permute.xlu0 %1723
      %1725 = vrot.lane.b32.xlu0 %v1710, 120
      %v1726 = vpop.permute.xlu0 %1725
      %v1735 = vadd.f32 %v1675, %v1712
      %v1736 = vadd.f32 %v1676, %v1714
      %v1737 = vadd.f32 %v1677, %v1716
      %v1738 = vadd.f32 %v1678, %v1718
      %v1739 = vadd.f32 %v1679, %v1720
      %v1740 = vadd.f32 %v1680, %v1722
      %v1741 = vadd.f32 %v1681, %v1724
      %v1742 = vadd.f32 %v1682, %v1726
      %1743 = vrot.lane.b32.xlu0 %v1687, 114
      %v1744 = vpop.permute.xlu0 %1743
      %v1746 = vadd.f32 %v1735, %v1744
      %v1747 = vadd.f32 %v1736, %v1744
      %v1748 = vadd.f32 %v1737, %v1744
      %v1749 = vadd.f32 %v1738, %v1744
      %v1750 = vadd.f32 %v1739, %v1744
      %v1751 = vadd.f32 %v1740, %v1744
      %v1752 = vadd.f32 %v1741, %v1744
      %v1753 = vadd.f32 %v1742, %v1744
      %v1755 = vperm.slane %v1694, 0
      %1756 = vrot.lane.b32.xlu0 %v1755, 8
      %v1757 = vpop.permute.xlu0 %1756
      %v1759 = vadd.f32 %v1692, %v1757
      %v1760 = vperm.slane %v1759, 0
      %v1761 = vadd.f32 %v1746, %v1760
      %v1762 = vadd.f32 %v1747, %v1760
      %v1763 = vadd.f32 %v1748, %v1760
      %v1764 = vadd.f32 %v1749, %v1760
      %v1765 = vadd.f32 %v1750, %v1760
      %v1766 = vadd.f32 %v1751, %v1760
      %v1767 = vadd.f32 %v1752, %v1760
      %v1768 = vadd.f32 %v1753, %v1760
      %v1770 = vperm.slane %v1693, 0
      %1771 = vrot.lane.b32.xlu0 %v1770, 28
      %v1772 = vpop.permute.xlu0 %1771
      %v1774 = vadd.f32 %v1687, %v1772
      %1776 = vrot.lane.b32.xlu0 %v1774, 100
      %v1777 = vpop.permute.xlu0 %1776
      %vm1779 = vcmask 48128
      %1780 = vst.msk [vmem:[%s544] sm:$0xff] %vm1779, %v1777
      %1789 = vrot.lane.b32.xlu0 %v1761, 120
      %v1790 = vpop.permute.xlu0 %1789
      %1791 = vrot.lane.b32.xlu0 %v1762, 120
      %v1792 = vpop.permute.xlu0 %1791
      %1793 = vrot.lane.b32.xlu0 %v1763, 120
      %v1794 = vpop.permute.xlu0 %1793
      %1795 = vrot.lane.b32.xlu0 %v1764, 120
      %v1796 = vpop.permute.xlu0 %1795
      %1797 = vrot.lane.b32.xlu0 %v1765, 120
      %v1798 = vpop.permute.xlu0 %1797
      %1799 = vrot.lane.b32.xlu0 %v1766, 120
      %v1800 = vpop.permute.xlu0 %1799
      %1801 = vrot.lane.b32.xlu0 %v1767, 120
      %v1802 = vpop.permute.xlu0 %1801
      %1803 = vrot.lane.b32.xlu0 %v1768, 120
      %v1804 = vpop.permute.xlu0 %1803
      %1813 = vst.msk [vmem:[%s549] sm:$0xff] %vm1779, %v1790
      %1814 = vst.msk [vmem:[%s549 + $0x8] sm:$0xff] %vm1779, %v1792
      %1815 = vst.msk [vmem:[%s549 + $0x10] sm:$0xff] %vm1779, %v1794
      %1816 = vst.msk [vmem:[%s549 + $0x18] sm:$0xff] %vm1779, %v1796
      %1817 = vst.msk [vmem:[%s549 + $0x20] sm:$0xff] %vm1779, %v1798
      %1818 = vst.msk [vmem:[%s549 + $0x28] sm:$0xff] %vm1779, %v1800
      %1819 = vst.msk [vmem:[%s549 + $0x30] sm:$0xff] %vm1779, %v1802
      %1820 = vst.msk [vmem:[%s549 + $0x38] sm:$0xff] %vm1779, %v1804
      %p1821 = scmp.lt.s32.totalorder %s28, 1
      %s1822 = scalar_select %p1821, %s28, 1
      %s1823 = smul.addr %s1822, 8
      %s1824 = scalar_lea.vmem %s15, %s1823
      %p1825 = scmp.lt.s32.totalorder %s28, 1
      %s1826 = scalar_select %p1825, %s28, 1
      %s1827 = smul.addr %s1826, 8
      %s1828 = smul.addr %s1827, 8
      %s1829 = scalar_lea.vmem %s16, %s1828
      // Predicated region
      $region81: #{tpu_custom_call.1} parent=79 // pred_check
        %p1830 = pneg %p371
      $region82: #{tpu_custom_call.1} parent=79 // pred_check_branch
        %1832 = sbr.rel (%p1830) target = $region84
      $region83: #{tpu_custom_call.1} parent=79 // pred_region
        _
      $region84: #{tpu_custom_call.1} parent=79 // pred_fallthru
        _
      // Predicated region
      $region85: #{tpu_custom_call.1} parent=79 // pred_check
        %p1833 = pneg %p397
      $region86: #{tpu_custom_call.1} parent=79 // pred_check_branch
        %1835 = sbr.rel (%p1833) target = $region88
      $region87: #{tpu_custom_call.1} parent=79 // pred_region
        _
      $region88: #{tpu_custom_call.1} parent=79 // pred_fallthru
        _
    $region80: #{tpu_custom_call.1} parent=5 // pred_fallthru
      _
    %p1836 = scmp.le.s32.totalorder 2, %s23
    // Predicated region
    $region89: #{tpu_custom_call.1} parent=5 // pred_check
      %p1837 = pneg %p1836
    $region90: #{tpu_custom_call.1} parent=5 // pred_check_branch
      %1839 = sbr.rel (%p1837) target = $region92
    $region91: #{tpu_custom_call.1} parent=5 // pred_region
      %s1840 = ssub.s32 %s23, 2
      // Predicated region
      $region93: #{tpu_custom_call.1} parent=91 // pred_check
        %p1841 = pneg %p377
      $region94: #{tpu_custom_call.1} parent=91 // pred_check_branch
        %1843 = sbr.rel (%p1841) target = $region96
      $region95: #{tpu_custom_call.1} parent=91 // pred_region
        %p1844 = scmp.lt.s32.totalorder %s29, 1
        %s1845 = scalar_select %p1844, %s29, 1
        %s1846 = smul.addr %s1845, 8
        %s1847 = scalar_lea.vmem %s15, %s1846
      $region96: #{tpu_custom_call.1} parent=91 // pred_fallthru
        _
      // Predicated region
      $region97: #{tpu_custom_call.1} parent=91 // pred_check
        %p1848 = pneg %p403
      $region98: #{tpu_custom_call.1} parent=91 // pred_check_branch
        %1850 = sbr.rel (%p1848) target = $region100
      $region99: #{tpu_custom_call.1} parent=91 // pred_region
        %p1851 = scmp.lt.s32.totalorder %s29, 1
        %s1852 = scalar_select %p1851, %s29, 1
        %s1853 = smul.addr %s1852, 8
        %s1854 = smul.addr %s1853, 8
        %s1855 = scalar_lea.vmem %s16, %s1854
      $region100: #{tpu_custom_call.1} parent=91 // pred_fallthru
        _
    $region92: #{tpu_custom_call.1} parent=5 // pred_fallthru
      _
  $region6: #{tpu_custom_call.1} parent=0 // loop_footer
    %s27 = sadd.s32 1, %s23
  $region7: #{tpu_custom_call.1} parent=0 // loop_footer_branch
    %22 = sbr.rel target = $region3
  $region8: #{tpu_custom_call.1} parent=0 // loop_exit
    _

</llo_original>
